<compile_context>
chip_gen: v6e
topology: v6e:2x2x1
jax: 0.10.0
libtpu: 0.0.40
codegen_flags: <defaults>
</compile_context>

<pallas_src>
import functools

import jax
import jax.numpy as jnp
from jax.experimental import pallas as pl
from jax.experimental.pallas import tpu as pltpu

Z_DIM = 128       # lane-aligned: each per-layer softmax is a clean 128-lane segment
Z_LAYERS = 2
HIDDEN = 128
TAU = 1.0
TILE_B = 512      # batch tile (rows) — sized against v7x's 64 MiB VMEM; v6e/v5e can go larger


def _round_up(a, b):
    return (a + b - 1) // b * b


def mdvae_fwd_kernel(x_ref, g_ref,
                     we1_ref, be1_ref, we2_ref, be2_ref,
                     wd1_ref, bd1_ref, wd2_ref, bd2_ref,
                     out_ref, *, z_layers, z_dim, tau):
    # --- encoder MLP (bf16 MXU matmuls, f32 accumulation) ---
    x = x_ref[...].astype(jnp.bfloat16)                               # (TB, in_dim)
    h = jnp.dot(x, we1_ref[...], preferred_element_type=jnp.float32) + be1_ref[...]
    h = jnp.maximum(h, 0.0)
    logits = jnp.dot(h.astype(jnp.bfloat16), we2_ref[...],
                     preferred_element_type=jnp.float32) + be2_ref[...]
    # logits: (TB, z_layers * z_dim); logical view is (TB, z_layers, z_dim)

    # --- gumbel-softmax, one softmax per contiguous 128-lane z segment (f32 math) ---
    y = (logits + g_ref[...]) * (1.0 / tau)
    parts = []
    for l in range(z_layers):                                         # static unrolled loop
        sl = slice(l * z_dim, (l + 1) * z_dim)
        y_l = y[:, sl]
        y_l = y_l - jnp.max(y_l, axis=-1, keepdims=True)
        e_l = jnp.exp(y_l)
        inv = pl.reciprocal(jnp.sum(e_l, axis=-1, keepdims=True), approx=True)
        parts.append(e_l * inv)                                       # soft one-hot (TB, z_dim)
    z = jnp.concatenate(parts, axis=-1)                               # (TB, z_layers*z_dim)

    # --- decoder MLP: single fused K=z_layers*z_dim dot, then tail ---
    h2 = jnp.dot(z.astype(jnp.bfloat16), wd1_ref[...],
                 preferred_element_type=jnp.float32) + bd1_ref[...]
    h2 = jnp.maximum(h2, 0.0)
    out_ref[...] = jnp.dot(h2.astype(jnp.bfloat16), wd2_ref[...],
                           preferred_element_type=jnp.float32) + bd2_ref[...]


def mdvae_forward(x_nchw, params, gumbel_noise, *,
                  z_layers=Z_LAYERS, z_dim=Z_DIM, tau=TAU, tile_b=TILE_B):
    """Full mDVAE.forward: x (B,C,H,W) -> reconstruction (B, C*H*W)."""
    B = x_nchw.shape[0]
    x = x_nchw.reshape(B, -1).astype(jnp.float32)
    in_dim = x.shape[1]
    zd = z_layers * z_dim

    # lane-alignment expectations (softmax segmentation + unmasked stores)
    assert z_dim % 128 == 0, "z_dim must be a multiple of 128 (lane-aligned segments)"
    assert in_dim % 128 == 0, "flattened input dim should be a multiple of 128"

    we1, be1, we2, be2, wd1, bd1, wd2, bd2 = params
    hidden = we1.shape[1]
    # cast matmul weights to bf16 once (biases stay f32)
    we1 = we1.astype(jnp.bfloat16)
    we2 = we2.astype(jnp.bfloat16)
    wd1 = wd1.astype(jnp.bfloat16)
    wd2 = wd2.astype(jnp.bfloat16)

    # pick a batch tile (multiple of 8 sublanes) and pad the batch to a tile multiple
    b8 = _round_up(B, 8)
    tb = min(tile_b, b8)
    b_pad = _round_up(B, tb)
    if b_pad != B:
        x = jnp.pad(x, ((0, b_pad - B), (0, 0)))
        g = jnp.pad(gumbel_noise.astype(jnp.float32), ((0, b_pad - B), (0, 0)))
    else:
        g = gumbel_noise.astype(jnp.float32)

    kern = functools.partial(mdvae_fwd_kernel,
                             z_layers=z_layers, z_dim=z_dim, tau=tau)

    resident = lambda i: (0, 0)   # weights/biases stay pinned in VMEM across the grid
    out = pl.pallas_call(
        kern,
        out_shape=jax.ShapeDtypeStruct((b_pad, in_dim), jnp.float32),
        grid=(b_pad // tb,),
        in_specs=[
            pl.BlockSpec((tb, in_dim), lambda i: (i, 0)),     # x tile
            pl.BlockSpec((tb, zd), lambda i: (i, 0)),         # gumbel noise tile
            pl.BlockSpec((in_dim, hidden), resident),         # we1
            pl.BlockSpec((1, hidden), resident),              # be1
            pl.BlockSpec((hidden, zd), resident),             # we2
            pl.BlockSpec((1, zd), resident),                  # be2
            pl.BlockSpec((zd, hidden), resident),             # wd1
            pl.BlockSpec((1, hidden), resident),              # bd1
            pl.BlockSpec((hidden, in_dim), resident),         # wd2
            pl.BlockSpec((1, in_dim), resident),              # bd2
        ],
        out_specs=pl.BlockSpec((tb, in_dim), lambda i: (i, 0)),
        compiler_params=pltpu.CompilerParams(
            dimension_semantics=("parallel",),
            vmem_limit_bytes=48 * 1024 * 1024),
    )(x, g, we1, be1, we2, be2, wd1, bd1, wd2, bd2)

    return out[:B]


def init_params(key, in_dim, hidden, z_layers, z_dim):
    """Deterministic synthetic weights for the encoder/decoder MLPs (f32 master copies)."""
    ks = jax.random.split(key, 8)

    def lin_w(k, fan_in, fan_out):
        return (jax.random.normal(k, (fan_in, fan_out), jnp.float32)
                / jnp.sqrt(jnp.float32(fan_in)))

    def lin_b(k, fan_out):
        return 0.01 * jax.random.normal(k, (1, fan_out), jnp.float32)

    zd = z_layers * z_dim
    we1, be1 = lin_w(ks[0], in_dim, hidden), lin_b(ks[1], hidden)
    we2, be2 = lin_w(ks[2], hidden, zd),     lin_b(ks[3], zd)
    wd1, bd1 = lin_w(ks[4], zd, hidden),     lin_b(ks[5], hidden)
    wd2, bd2 = lin_w(ks[6], hidden, in_dim), lin_b(ks[7], in_dim)
    return (we1, be1, we2, be2, wd1, bd1, wd2, bd2)


if __name__ == "__main__":
    key = jax.random.PRNGKey(0)
    kx, kg, kp = jax.random.split(key, 3)

    B, C, H, W = 2, 4, 16, 16
    in_dim = C * H * W

    x = jax.random.normal(kx, (B, C, H, W), jnp.float32)
    params = init_params(kp, in_dim, HIDDEN, Z_LAYERS, Z_DIM)

    # Gumbel noise exactly as torch's gumbel_softmax: g = -log(E), E ~ Exp(1)
    expo = jax.random.exponential(kg, (B, Z_LAYERS * Z_DIM), dtype=jnp.float32)
    gumbel_noise = -jnp.log(expo)

    out = mdvae_forward(x, params, gumbel_noise)
    jax.block_until_ready(out)

    assert out.shape == (B, in_dim) and out.dtype == jnp.float32
    assert bool(jnp.all(jnp.isfinite(out)))

    # TODO(synk): eval-mode reparameterize (argmax + hard one_hot) branch not implemented;
    # nn.Module.forward in training mode (soft gumbel-softmax) is what this kernel computes.
    print("KERNEL_OK")
</pallas_src>

<mosaic_0001>
module attributes {stable_mosaic.version = 11 : i64} {
  func.func @mdvae_fwd_kernel(%arg0: i32, %arg1: memref<8x1024xf32, #tpu.memory_space<vmem>>, %arg2: memref<8x256xf32, #tpu.memory_space<vmem>>, %arg3: memref<1024x128xbf16, #tpu.memory_space<vmem>>, %arg4: memref<1x128xf32, #tpu.memory_space<vmem>>, %arg5: memref<128x256xbf16, #tpu.memory_space<vmem>>, %arg6: memref<1x256xf32, #tpu.memory_space<vmem>>, %arg7: memref<256x128xbf16, #tpu.memory_space<vmem>>, %arg8: memref<1x128xf32, #tpu.memory_space<vmem>>, %arg9: memref<128x1024xbf16, #tpu.memory_space<vmem>>, %arg10: memref<1x1024xf32, #tpu.memory_space<vmem>>, %arg11: memref<8x1024xf32, #tpu.memory_space<vmem>>) attributes {dimension_semantics = [#tpu.dimension_semantics<parallel>], iteration_bounds = array<i64: 1>, scalar_prefetch = 0 : i64, scratch_operands = 0 : i64, tpu.core_type = #tpu.core_type<tc>, window_params = [{transform_indices = @transform_0, window_bounds = array<i64: 8, 1024>}, {transform_indices = @transform_1, window_bounds = array<i64: 8, 256>}, {pipeline_mode = #tpu.pipeline_mode<synchronous>, transform_indices = @transform_2, window_bounds = array<i64: 1024, 128>}, {pipeline_mode = #tpu.pipeline_mode<synchronous>, transform_indices = @transform_3, window_bounds = array<i64: 1, 128>}, {pipeline_mode = #tpu.pipeline_mode<synchronous>, transform_indices = @transform_4, window_bounds = array<i64: 128, 256>}, {pipeline_mode = #tpu.pipeline_mode<synchronous>, transform_indices = @transform_5, window_bounds = array<i64: 1, 256>}, {pipeline_mode = #tpu.pipeline_mode<synchronous>, transform_indices = @transform_6, window_bounds = array<i64: 256, 128>}, {pipeline_mode = #tpu.pipeline_mode<synchronous>, transform_indices = @transform_7, window_bounds = array<i64: 1, 128>}, {pipeline_mode = #tpu.pipeline_mode<synchronous>, transform_indices = @transform_8, window_bounds = array<i64: 128, 1024>}, {pipeline_mode = #tpu.pipeline_mode<synchronous>, transform_indices = @transform_9, window_bounds = array<i64: 1, 1024>}, {transform_indices = @transform_10, window_bounds = array<i64: 8, 1024>}]} {
    %c0 = arith.constant 0 : index
    %c0_0 = arith.constant 0 : index
    %0 = vector.load %arg1[%c0, %c0_0] : memref<8x1024xf32, #tpu.memory_space<vmem>>, vector<8x1024xf32>
    %1 = arith.truncf %0 : vector<8x1024xf32> to vector<8x1024xbf16>
    %c0_1 = arith.constant 0 : index
    %c0_2 = arith.constant 0 : index
    %2 = vector.load %arg3[%c0_1, %c0_2] : memref<1024x128xbf16, #tpu.memory_space<vmem>>, vector<1024x128xbf16>
    %cst = arith.constant dense<0.000000e+00> : vector<8x128xf32>
    %3 = tpu.matmul %1, %2, %cst {dimension_numbers = #tpu.dot_dimension_numbers<[1], [0], [0], [1], [0, 0, 1, 1], [], []>} : vector<8x1024xbf16>, vector<1024x128xbf16>, vector<8x128xf32> -> vector<8x128xf32>
    %c0_3 = arith.constant 0 : index
    %c0_4 = arith.constant 0 : index
    %4 = vector.load %arg4[%c0_3, %c0_4] : memref<1x128xf32, #tpu.memory_space<vmem>>, vector<1x128xf32>
    %5 = vector.broadcast %4 : vector<1x128xf32> to vector<8x128xf32>
    %6 = arith.addf %3, %5 : vector<8x128xf32>
    %cst_5 = arith.constant 0.000000e+00 : f32
    %7 = vector.broadcast %cst_5 : f32 to vector<8x128xf32>
    %8 = arith.maximumf %6, %7 : vector<8x128xf32>
    %9 = arith.truncf %8 : vector<8x128xf32> to vector<8x128xbf16>
    %c0_6 = arith.constant 0 : index
    %c0_7 = arith.constant 0 : index
    %10 = vector.load %arg5[%c0_6, %c0_7] : memref<128x256xbf16, #tpu.memory_space<vmem>>, vector<128x256xbf16>
    %cst_8 = arith.constant dense<0.000000e+00> : vector<8x256xf32>
    %11 = tpu.matmul %9, %10, %cst_8 {dimension_numbers = #tpu.dot_dimension_numbers<[1], [0], [0], [1], [0, 0, 1, 1], [], []>} : vector<8x128xbf16>, vector<128x256xbf16>, vector<8x256xf32> -> vector<8x256xf32>
    %c0_9 = arith.constant 0 : index
    %c0_10 = arith.constant 0 : index
    %12 = vector.load %arg6[%c0_9, %c0_10] : memref<1x256xf32, #tpu.memory_space<vmem>>, vector<1x256xf32>
    %13 = vector.broadcast %12 : vector<1x256xf32> to vector<8x256xf32>
    %14 = arith.addf %11, %13 : vector<8x256xf32>
    %c0_11 = arith.constant 0 : index
    %c0_12 = arith.constant 0 : index
    %15 = vector.load %arg2[%c0_11, %c0_12] : memref<8x256xf32, #tpu.memory_space<vmem>>, vector<8x256xf32>
    %16 = arith.addf %14, %15 : vector<8x256xf32>
    %cst_13 = arith.constant 1.000000e+00 : f32
    %17 = vector.broadcast %cst_13 : f32 to vector<8x256xf32>
    %18 = arith.mulf %16, %17 : vector<8x256xf32>
    %19 = vector.extract_strided_slice %18 {offsets = [0, 0], sizes = [8, 128], strides = [1, 1]} : vector<8x256xf32> to vector<8x128xf32>
    %cst_14 = arith.constant dense<0xFF800000> : vector<8xf32>
    %20 = vector.multi_reduction <maximumf>, %19, %cst_14 [1] : vector<8x128xf32> to vector<8xf32>
    %21 = vector.shape_cast %20 : vector<8xf32> to vector<8x1xf32>
    %22 = vector.broadcast %21 : vector<8x1xf32> to vector<8x128xf32>
    %23 = arith.subf %19, %22 : vector<8x128xf32>
    %24 = math.exp %23 : vector<8x128xf32>
    %cst_15 = arith.constant dense<0.000000e+00> : vector<8xf32>
    %25 = vector.multi_reduction <add>, %24, %cst_15 [1] : vector<8x128xf32> to vector<8xf32>
    %26 = vector.shape_cast %25 : vector<8xf32> to vector<8x1xf32>
    %27 = tpu.reciprocal %26 {approx = true} : vector<8x1xf32> -> vector<8x1xf32>
    %28 = vector.broadcast %27 : vector<8x1xf32> to vector<8x128xf32>
    %29 = arith.mulf %24, %28 : vector<8x128xf32>
    %30 = vector.extract_strided_slice %18 {offsets = [0, 128], sizes = [8, 128], strides = [1, 1]} : vector<8x256xf32> to vector<8x128xf32>
    %cst_16 = arith.constant dense<0xFF800000> : vector<8xf32>
    %31 = vector.multi_reduction <maximumf>, %30, %cst_16 [1] : vector<8x128xf32> to vector<8xf32>
    %32 = vector.shape_cast %31 : vector<8xf32> to vector<8x1xf32>
    %33 = vector.broadcast %32 : vector<8x1xf32> to vector<8x128xf32>
    %34 = arith.subf %30, %33 : vector<8x128xf32>
    %35 = math.exp %34 : vector<8x128xf32>
    %cst_17 = arith.constant dense<0.000000e+00> : vector<8xf32>
    %36 = vector.multi_reduction <add>, %35, %cst_17 [1] : vector<8x128xf32> to vector<8xf32>
    %37 = vector.shape_cast %36 : vector<8xf32> to vector<8x1xf32>
    %38 = tpu.reciprocal %37 {approx = true} : vector<8x1xf32> -> vector<8x1xf32>
    %39 = vector.broadcast %38 : vector<8x1xf32> to vector<8x128xf32>
    %40 = arith.mulf %35, %39 : vector<8x128xf32>
    %41 = tpu.concatenate %29, %40 in 1 : vector<8x128xf32>, vector<8x128xf32> -> vector<8x256xf32>
    %42 = arith.truncf %41 : vector<8x256xf32> to vector<8x256xbf16>
    %c0_18 = arith.constant 0 : index
    %c0_19 = arith.constant 0 : index
    %43 = vector.load %arg7[%c0_18, %c0_19] : memref<256x128xbf16, #tpu.memory_space<vmem>>, vector<256x128xbf16>
    %cst_20 = arith.constant dense<0.000000e+00> : vector<8x128xf32>
    %44 = tpu.matmul %42, %43, %cst_20 {dimension_numbers = #tpu.dot_dimension_numbers<[1], [0], [0], [1], [0, 0, 1, 1], [], []>} : vector<8x256xbf16>, vector<256x128xbf16>, vector<8x128xf32> -> vector<8x128xf32>
    %c0_21 = arith.constant 0 : index
    %c0_22 = arith.constant 0 : index
    %45 = vector.load %arg8[%c0_21, %c0_22] : memref<1x128xf32, #tpu.memory_space<vmem>>, vector<1x128xf32>
    %46 = vector.broadcast %45 : vector<1x128xf32> to vector<8x128xf32>
    %47 = arith.addf %44, %46 : vector<8x128xf32>
    %cst_23 = arith.constant 0.000000e+00 : f32
    %48 = vector.broadcast %cst_23 : f32 to vector<8x128xf32>
    %49 = arith.maximumf %47, %48 : vector<8x128xf32>
    %50 = arith.truncf %49 : vector<8x128xf32> to vector<8x128xbf16>
    %c0_24 = arith.constant 0 : index
    %c0_25 = arith.constant 0 : index
    %51 = vector.load %arg9[%c0_24, %c0_25] : memref<128x1024xbf16, #tpu.memory_space<vmem>>, vector<128x1024xbf16>
    %cst_26 = arith.constant dense<0.000000e+00> : vector<8x1024xf32>
    %52 = tpu.matmul %50, %51, %cst_26 {dimension_numbers = #tpu.dot_dimension_numbers<[1], [0], [0], [1], [0, 0, 1, 1], [], []>} : vector<8x128xbf16>, vector<128x1024xbf16>, vector<8x1024xf32> -> vector<8x1024xf32>
    %c0_27 = arith.constant 0 : index
    %c0_28 = arith.constant 0 : index
    %53 = vector.load %arg10[%c0_27, %c0_28] : memref<1x1024xf32, #tpu.memory_space<vmem>>, vector<1x1024xf32>
    %54 = vector.broadcast %53 : vector<1x1024xf32> to vector<8x1024xf32>
    %55 = arith.addf %52, %54 : vector<8x1024xf32>
    %c0_29 = arith.constant 0 : index
    %c0_30 = arith.constant 0 : index
    %56 = vector.load %arg11[%c0_29, %c0_30] : memref<8x1024xf32, #tpu.memory_space<vmem>>, vector<8x1024xf32>
    tpu.vector_store %arg11[%c0_29, %c0_30], %55 {strides = array<i32>} : memref<8x1024xf32, #tpu.memory_space<vmem>>, vector<8x1024xf32>,
    return
  }
  func.func @transform_0(%arg0: i32) -> (i32, i32) {
    %c0_i32 = arith.constant 0 : i32
    %c0_i32_0 = arith.constant 0 : i32
    return %arg0, %c0_i32 : i32, i32
  }
  func.func @transform_1(%arg0: i32) -> (i32, i32) {
    %c0_i32 = arith.constant 0 : i32
    %c0_i32_0 = arith.constant 0 : i32
    return %arg0, %c0_i32 : i32, i32
  }
  func.func @transform_2(%arg0: i32) -> (i32, i32) {
    %c0_i32 = arith.constant 0 : i32
    %c0_i32_0 = arith.constant 0 : i32
    %c0_i32_1 = arith.constant 0 : i32
    return %c0_i32, %c0_i32_0 : i32, i32
  }
  func.func @transform_3(%arg0: i32) -> (i32, i32) {
    %c0_i32 = arith.constant 0 : i32
    %c0_i32_0 = arith.constant 0 : i32
    %c0_i32_1 = arith.constant 0 : i32
    return %c0_i32, %c0_i32_0 : i32, i32
  }
  func.func @transform_4(%arg0: i32) -> (i32, i32) {
    %c0_i32 = arith.constant 0 : i32
    %c0_i32_0 = arith.constant 0 : i32
    %c0_i32_1 = arith.constant 0 : i32
    return %c0_i32, %c0_i32_0 : i32, i32
  }
  func.func @transform_5(%arg0: i32) -> (i32, i32) {
    %c0_i32 = arith.constant 0 : i32
    %c0_i32_0 = arith.constant 0 : i32
    %c0_i32_1 = arith.constant 0 : i32
    return %c0_i32, %c0_i32_0 : i32, i32
  }
  func.func @transform_6(%arg0: i32) -> (i32, i32) {
    %c0_i32 = arith.constant 0 : i32
    %c0_i32_0 = arith.constant 0 : i32
    %c0_i32_1 = arith.constant 0 : i32
    return %c0_i32, %c0_i32_0 : i32, i32
  }
  func.func @transform_7(%arg0: i32) -> (i32, i32) {
    %c0_i32 = arith.constant 0 : i32
    %c0_i32_0 = arith.constant 0 : i32
    %c0_i32_1 = arith.constant 0 : i32
    return %c0_i32, %c0_i32_0 : i32, i32
  }
  func.func @transform_8(%arg0: i32) -> (i32, i32) {
    %c0_i32 = arith.constant 0 : i32
    %c0_i32_0 = arith.constant 0 : i32
    %c0_i32_1 = arith.constant 0 : i32
    return %c0_i32, %c0_i32_0 : i32, i32
  }
  func.func @transform_9(%arg0: i32) -> (i32, i32) {
    %c0_i32 = arith.constant 0 : i32
    %c0_i32_0 = arith.constant 0 : i32
    %c0_i32_1 = arith.constant 0 : i32
    return %c0_i32, %c0_i32_0 : i32, i32
  }
  func.func @transform_10(%arg0: i32) -> (i32, i32) {
    %c0_i32 = arith.constant 0 : i32
    %c0_i32_0 = arith.constant 0 : i32
    return %arg0, %c0_i32 : i32, i32
  }
}

</mosaic_0001>

<llo_original>
// kernel: tpu_custom_call.1
$region0: #{tpu_custom_call.1}
  #allocation0 [shape = 'u32[]', space=smem, size = 0x4, offset = 0x4, fixed_abs, tag = 'smem constant byte address 0x4 - core index']
  #allocation1 [shape = 'u32[144,128]{1,0:T(1,128)}', space=vmem, size = 0x12000, scoped, tag = 'internal scratch']
  %s0 = inlined_call_operand.hbm [shape: f32[8,1024], index: 0, kind: input, shape index: {}]
  %s1 = inlined_call_operand.hbm [shape: f32[8,256], index: 1, kind: input, shape index: {}]
  %s2 = inlined_call_operand.hbm [shape: bf16[1024,128], index: 2, kind: input, shape index: {}]
  %s3 = inlined_call_operand.vmem [shape: f32[1,128], index: 3, kind: input, shape index: {}]
  %s4 = inlined_call_operand.hbm [shape: bf16[128,256], index: 4, kind: input, shape index: {}]
  %s5 = inlined_call_operand.vmem [shape: f32[1,256], index: 5, kind: input, shape index: {}]
  %s6 = inlined_call_operand.hbm [shape: bf16[256,128], index: 6, kind: input, shape index: {}]
  %s7 = inlined_call_operand.vmem [shape: f32[1,128], index: 7, kind: input, shape index: {}]
  %s8 = inlined_call_operand.hbm [shape: bf16[128,1024], index: 8, kind: input, shape index: {}]
  %s9 = inlined_call_operand.vmem [shape: f32[1,1024], index: 9, kind: input, shape index: {}]
  %s10 = inlined_call_operand.hbm [shape: f32[8,1024], index: 10, kind: output, shape index: {}]
  %s11 = sld [smem:[#allocation0]]
  $region74: #{tpu_custom_call.1} parent=0
    _
  %s13 = ssub.s32 1, %s11
  %s14 = scalar_select 0, %s13, %s11
  $region1: #{tpu_custom_call.1} parent=0
    #allocation2 [shape = 'u8[32768]{0}', space=vmem, size = 0x8000, scoped, tag = 'input window, operand 0, single buffered']
    #allocation3 [shape = 's32[1]{0}', space=sflag, size = 0x4, scoped, tag = 'scoped memory for tpu_custom_call.1']
    #allocation4 [shape = 's32[1]{0}', space=sflag, size = 0x4, scoped, tag = 'scoped memory for tpu_custom_call.1']
    #allocation5 [shape = 'u8[8192]{0}', space=vmem, size = 0x2000, scoped, tag = 'input window, operand 1, single buffered']
    #allocation6 [shape = 's32[1]{0}', space=sflag, size = 0x4, scoped, tag = 'scoped memory for tpu_custom_call.1']
    #allocation7 [shape = 'u8[262144]{0}', space=vmem, size = 0x40000, scoped, tag = 'input window, operand 2, single buffered']
    #allocation8 [shape = 'u8[65536]{0}', space=vmem, size = 0x10000, scoped, tag = 'input window, operand 4, single buffered']
    #allocation9 [shape = 's32[1]{0}', space=sflag, size = 0x4, scoped, tag = 'scoped memory for tpu_custom_call.1']
    #allocation10 [shape = 'u8[65536]{0}', space=vmem, size = 0x10000, scoped, tag = 'input window, operand 6, single buffered']
    #allocation11 [shape = 'u8[262144]{0}', space=vmem, size = 0x40000, scoped, tag = 'input window, operand 8, single buffered']
    #allocation12 [shape = 's32[1]{0}', space=sflag, size = 0x4, scoped, tag = 'scoped memory for tpu_custom_call.1']
    #allocation13 [shape = 'u8[32768]{0}', space=vmem, size = 0x8000, scoped, tag = 'output window, operand 0, single buffered']
    %15 = vsyncpa [#allocation3], 0
    %16 = vsyncpa [#allocation6], 0
    %17 = vsyncpa [#allocation9], 0
    %18 = vsyncpa [#allocation12], 0
    %19 = vsyncpa [#allocation4], 0
    // Predicated region
    $region2: #{tpu_custom_call.1} parent=1 // pred_check
      _
    $region3: #{tpu_custom_call.1} parent=1 // pred_check_branch
      %21 = sbr.rel (0) target = $region5
    $region4: #{tpu_custom_call.1} parent=1 // pred_region
      %s23 = ssub.s32 1024, 1024
      %24 = vsyncadd [#allocation3], %s23
      %s26 = sshll.u32 [#allocation2], 4
      %s27 = int_to_ptr.vmem [resolvable:$true] %s26
      %29 = dma.hbm_to_vmem [thread:$0]  %s0, 1024, %s27, [#allocation3]
    $region5: #{tpu_custom_call.1} parent=1 // pred_fallthru
      _
    // Predicated region
    $region6: #{tpu_custom_call.1} parent=1 // pred_check
      _
    $region7: #{tpu_custom_call.1} parent=1 // pred_check_branch
      %31 = sbr.rel (0) target = $region9
    $region8: #{tpu_custom_call.1} parent=1 // pred_region
      %s33 = ssub.s32 256, 256
      %34 = vsyncadd [#allocation6], %s33
      %s36 = sshll.u32 [#allocation5], 4
      %s37 = int_to_ptr.vmem [resolvable:$true] %s36
      %39 = dma.hbm_to_vmem [thread:$0]  %s1, 256, %s37, [#allocation6]
    $region9: #{tpu_custom_call.1} parent=1 // pred_fallthru
      _
    // Predicated region
    $region10: #{tpu_custom_call.1} parent=1 // pred_check
      _
    $region11: #{tpu_custom_call.1} parent=1 // pred_check_branch
      %41 = sbr.rel (0) target = $region13
    $region12: #{tpu_custom_call.1} parent=1 // pred_region
      %s43 = ssub.s32 8192, 8192
      %44 = vsyncadd [#allocation6], %s43
      %s45 = sshll.u32 [#allocation7], 4
      %s46 = int_to_ptr.vmem [resolvable:$true] %s45
      %51 = dma.hbm_to_vmem [thread:$0]  %s2, 8192, %s46, [#allocation6], 64, 64, 4
    $region13: #{tpu_custom_call.1} parent=1 // pred_fallthru
      _
    // Predicated region
    $region14: #{tpu_custom_call.1} parent=1 // pred_check
      _
    $region15: #{tpu_custom_call.1} parent=1 // pred_check_branch
      %53 = sbr.rel (0) target = $region17
    $region16: #{tpu_custom_call.1} parent=1 // pred_region
      _
    $region17: #{tpu_custom_call.1} parent=1 // pred_fallthru
      _
    // Predicated region
    $region18: #{tpu_custom_call.1} parent=1 // pred_check
      _
    $region19: #{tpu_custom_call.1} parent=1 // pred_check_branch
      %55 = sbr.rel (0) target = $region21
    $region20: #{tpu_custom_call.1} parent=1 // pred_region
      %s57 = ssub.s32 2048, 2048
      %58 = vsyncadd [#allocation9], %s57
      %s59 = sshll.u32 [#allocation8], 4
      %s60 = int_to_ptr.vmem [resolvable:$true] %s59
      %65 = dma.hbm_to_vmem [thread:$0]  %s4, 2048, %s60, [#allocation9], 128, 128, 8
    $region21: #{tpu_custom_call.1} parent=1 // pred_fallthru
      _
    // Predicated region
    $region22: #{tpu_custom_call.1} parent=1 // pred_check
      _
    $region23: #{tpu_custom_call.1} parent=1 // pred_check_branch
      %67 = sbr.rel (0) target = $region25
    $region24: #{tpu_custom_call.1} parent=1 // pred_region
      _
    $region25: #{tpu_custom_call.1} parent=1 // pred_fallthru
      _
    // Predicated region
    $region26: #{tpu_custom_call.1} parent=1 // pred_check
      _
    $region27: #{tpu_custom_call.1} parent=1 // pred_check_branch
      %69 = sbr.rel (0) target = $region29
    $region28: #{tpu_custom_call.1} parent=1 // pred_region
      %s71 = ssub.s32 2048, 2048
      %72 = vsyncadd [#allocation9], %s71
      %s73 = sshll.u32 [#allocation10], 4
      %s74 = int_to_ptr.vmem [resolvable:$true] %s73
      %79 = dma.hbm_to_vmem [thread:$0]  %s6, 2048, %s74, [#allocation9], 64, 64, 4
    $region29: #{tpu_custom_call.1} parent=1 // pred_fallthru
      _
    // Predicated region
    $region30: #{tpu_custom_call.1} parent=1 // pred_check
      _
    $region31: #{tpu_custom_call.1} parent=1 // pred_check_branch
      %81 = sbr.rel (0) target = $region33
    $region32: #{tpu_custom_call.1} parent=1 // pred_region
      _
    $region33: #{tpu_custom_call.1} parent=1 // pred_fallthru
      _
    // Predicated region
    $region34: #{tpu_custom_call.1} parent=1 // pred_check
      _
    $region35: #{tpu_custom_call.1} parent=1 // pred_check_branch
      %83 = sbr.rel (0) target = $region37
    $region36: #{tpu_custom_call.1} parent=1 // pred_region
      %s85 = ssub.s32 8192, 8192
      %86 = vsyncadd [#allocation12], %s85
      %s87 = sshll.u32 [#allocation11], 4
      %s88 = int_to_ptr.vmem [resolvable:$true] %s87
      %93 = dma.hbm_to_vmem [thread:$0]  %s8, 8192, %s88, [#allocation12], 512, 512, 32
    $region37: #{tpu_custom_call.1} parent=1 // pred_fallthru
      _
    // Predicated region
    $region38: #{tpu_custom_call.1} parent=1 // pred_check
      _
    $region39: #{tpu_custom_call.1} parent=1 // pred_check_branch
      %95 = sbr.rel (0) target = $region41
    $region40: #{tpu_custom_call.1} parent=1 // pred_region
      _
    $region41: #{tpu_custom_call.1} parent=1 // pred_fallthru
      _
    // Predicated region
    $region42: #{tpu_custom_call.1} parent=1 // pred_check
      _
    $region43: #{tpu_custom_call.1} parent=1 // pred_check_branch
      %97 = sbr.rel (0) target = $region45
    $region44: #{tpu_custom_call.1} parent=1 // pred_region
      %98 = dma.done [#allocation3], 1024
    $region45: #{tpu_custom_call.1} parent=1 // pred_fallthru
      _
    // Predicated region
    $region46: #{tpu_custom_call.1} parent=1 // pred_check
      _
    $region47: #{tpu_custom_call.1} parent=1 // pred_check_branch
      %100 = sbr.rel (0) target = $region49
    $region48: #{tpu_custom_call.1} parent=1 // pred_region
      %101 = dma.done [#allocation6], 256
    $region49: #{tpu_custom_call.1} parent=1 // pred_fallthru
      _
    // Predicated region
    $region50: #{tpu_custom_call.1} parent=1 // pred_check
      _
    $region51: #{tpu_custom_call.1} parent=1 // pred_check_branch
      %103 = sbr.rel (0) target = $region53
    $region52: #{tpu_custom_call.1} parent=1 // pred_region
      %104 = dma.done [#allocation6], 8192
    $region53: #{tpu_custom_call.1} parent=1 // pred_fallthru
      _
    // Predicated region
    $region54: #{tpu_custom_call.1} parent=1 // pred_check
      _
    $region55: #{tpu_custom_call.1} parent=1 // pred_check_branch
      %106 = sbr.rel (0) target = $region57
    $region56: #{tpu_custom_call.1} parent=1 // pred_region
      %107 = dma.done [#allocation9], 2048
    $region57: #{tpu_custom_call.1} parent=1 // pred_fallthru
      _
    // Predicated region
    $region58: #{tpu_custom_call.1} parent=1 // pred_check
      _
    $region59: #{tpu_custom_call.1} parent=1 // pred_check_branch
      %109 = sbr.rel (0) target = $region61
    $region60: #{tpu_custom_call.1} parent=1 // pred_region
      %110 = dma.done [#allocation9], 2048
    $region61: #{tpu_custom_call.1} parent=1 // pred_fallthru
      _
    // Predicated region
    $region62: #{tpu_custom_call.1} parent=1 // pred_check
      _
    $region63: #{tpu_custom_call.1} parent=1 // pred_check_branch
      %112 = sbr.rel (0) target = $region65
    $region64: #{tpu_custom_call.1} parent=1 // pred_region
      %113 = dma.done [#allocation12], 8192
    $region65: #{tpu_custom_call.1} parent=1 // pred_fallthru
      _
    %v115 = vld [vmem:[#allocation2] sm:$0xff]
    %v116 = vld [vmem:[#allocation2 + $0x8] sm:$0xff]
    %v117 = vld [vmem:[#allocation2 + $0x10] sm:$0xff]
    %v118 = vld [vmem:[#allocation2 + $0x18] sm:$0xff]
    %v119 = vld [vmem:[#allocation2 + $0x20] sm:$0xff]
    %v120 = vld [vmem:[#allocation2 + $0x28] sm:$0xff]
    %v121 = vld [vmem:[#allocation2 + $0x30] sm:$0xff]
    %v122 = vld [vmem:[#allocation2 + $0x38] sm:$0xff]
    %v123 = vpack.c.bf16 %v115, %v115
    %v124 = vpack.c.bf16 %v116, %v116
    %v125 = vpack.c.bf16 %v117, %v117
    %v126 = vpack.c.bf16 %v118, %v118
    %v127 = vpack.c.bf16 %v119, %v119
    %v128 = vpack.c.bf16 %v120, %v120
    %v129 = vpack.c.bf16 %v121, %v121
    %v130 = vpack.c.bf16 %v122, %v122
    %v131 = vld [vmem:[#allocation7] sm:$0xf]
    %v132 = vld [vmem:[#allocation7 + $0x4] sm:$0xf]
    %v133 = vld [vmem:[#allocation7 + $0x8] sm:$0xf]
    %v134 = vld [vmem:[#allocation7 + $0xc] sm:$0xf]
    %v135 = vld [vmem:[#allocation7 + $0x10] sm:$0xf]
    %v136 = vld [vmem:[#allocation7 + $0x14] sm:$0xf]
    %v137 = vld [vmem:[#allocation7 + $0x18] sm:$0xf]
    %v138 = vld [vmem:[#allocation7 + $0x1c] sm:$0xf]
    %v139 = vld [vmem:[#allocation7 + $0x20] sm:$0xf]
    %v140 = vld [vmem:[#allocation7 + $0x24] sm:$0xf]
    %v141 = vld [vmem:[#allocation7 + $0x28] sm:$0xf]
    %v142 = vld [vmem:[#allocation7 + $0x2c] sm:$0xf]
    %v143 = vld [vmem:[#allocation7 + $0x30] sm:$0xf]
    %v144 = vld [vmem:[#allocation7 + $0x34] sm:$0xf]
    %v145 = vld [vmem:[#allocation7 + $0x38] sm:$0xf]
    %v146 = vld [vmem:[#allocation7 + $0x3c] sm:$0xf]
    %v147 = vld [vmem:[#allocation7 + $0x40] sm:$0xf]
    %v148 = vld [vmem:[#allocation7 + $0x44] sm:$0xf]
    %v149 = vld [vmem:[#allocation7 + $0x48] sm:$0xf]
    %v150 = vld [vmem:[#allocation7 + $0x4c] sm:$0xf]
    %v151 = vld [vmem:[#allocation7 + $0x50] sm:$0xf]
    %v152 = vld [vmem:[#allocation7 + $0x54] sm:$0xf]
    %v153 = vld [vmem:[#allocation7 + $0x58] sm:$0xf]
    %v154 = vld [vmem:[#allocation7 + $0x5c] sm:$0xf]
    %v155 = vld [vmem:[#allocation7 + $0x60] sm:$0xf]
    %v156 = vld [vmem:[#allocation7 + $0x64] sm:$0xf]
    %v157 = vld [vmem:[#allocation7 + $0x68] sm:$0xf]
    %v158 = vld [vmem:[#allocation7 + $0x6c] sm:$0xf]
    %v159 = vld [vmem:[#allocation7 + $0x70] sm:$0xf]
    %v160 = vld [vmem:[#allocation7 + $0x74] sm:$0xf]
    %v161 = vld [vmem:[#allocation7 + $0x78] sm:$0xf]
    %v162 = vld [vmem:[#allocation7 + $0x7c] sm:$0xf]
    %v163 = vld [vmem:[#allocation7 + $0x80] sm:$0xf]
    %v164 = vld [vmem:[#allocation7 + $0x84] sm:$0xf]
    %v165 = vld [vmem:[#allocation7 + $0x88] sm:$0xf]
    %v166 = vld [vmem:[#allocation7 + $0x8c] sm:$0xf]
    %v167 = vld [vmem:[#allocation7 + $0x90] sm:$0xf]
    %v168 = vld [vmem:[#allocation7 + $0x94] sm:$0xf]
    %v169 = vld [vmem:[#allocation7 + $0x98] sm:$0xf]
    %v170 = vld [vmem:[#allocation7 + $0x9c] sm:$0xf]
    %v171 = vld [vmem:[#allocation7 + $0xa0] sm:$0xf]
    %v172 = vld [vmem:[#allocation7 + $0xa4] sm:$0xf]
    %v173 = vld [vmem:[#allocation7 + $0xa8] sm:$0xf]
    %v174 = vld [vmem:[#allocation7 + $0xac] sm:$0xf]
    %v175 = vld [vmem:[#allocation7 + $0xb0] sm:$0xf]
    %v176 = vld [vmem:[#allocation7 + $0xb4] sm:$0xf]
    %v177 = vld [vmem:[#allocation7 + $0xb8] sm:$0xf]
    %v178 = vld [vmem:[#allocation7 + $0xbc] sm:$0xf]
    %v179 = vld [vmem:[#allocation7 + $0xc0] sm:$0xf]
    %v180 = vld [vmem:[#allocation7 + $0xc4] sm:$0xf]
    %v181 = vld [vmem:[#allocation7 + $0xc8] sm:$0xf]
    %v182 = vld [vmem:[#allocation7 + $0xcc] sm:$0xf]
    %v183 = vld [vmem:[#allocation7 + $0xd0] sm:$0xf]
    %v184 = vld [vmem:[#allocation7 + $0xd4] sm:$0xf]
    %v185 = vld [vmem:[#allocation7 + $0xd8] sm:$0xf]
    %v186 = vld [vmem:[#allocation7 + $0xdc] sm:$0xf]
    %v187 = vld [vmem:[#allocation7 + $0xe0] sm:$0xf]
    %v188 = vld [vmem:[#allocation7 + $0xe4] sm:$0xf]
    %v189 = vld [vmem:[#allocation7 + $0xe8] sm:$0xf]
    %v190 = vld [vmem:[#allocation7 + $0xec] sm:$0xf]
    %v191 = vld [vmem:[#allocation7 + $0xf0] sm:$0xf]
    %v192 = vld [vmem:[#allocation7 + $0xf4] sm:$0xf]
    %v193 = vld [vmem:[#allocation7 + $0xf8] sm:$0xf]
    %v194 = vld [vmem:[#allocation7 + $0xfc] sm:$0xf]
    %v195 = vld [vmem:[#allocation7 + $0x100] sm:$0xf]
    %v196 = vld [vmem:[#allocation7 + $0x104] sm:$0xf]
    %v197 = vld [vmem:[#allocation7 + $0x108] sm:$0xf]
    %v198 = vld [vmem:[#allocation7 + $0x10c] sm:$0xf]
    %v199 = vld [vmem:[#allocation7 + $0x110] sm:$0xf]
    %v200 = vld [vmem:[#allocation7 + $0x114] sm:$0xf]
    %v201 = vld [vmem:[#allocation7 + $0x118] sm:$0xf]
    %v202 = vld [vmem:[#allocation7 + $0x11c] sm:$0xf]
    %v203 = vld [vmem:[#allocation7 + $0x120] sm:$0xf]
    %v204 = vld [vmem:[#allocation7 + $0x124] sm:$0xf]
    %v205 = vld [vmem:[#allocation7 + $0x128] sm:$0xf]
    %v206 = vld [vmem:[#allocation7 + $0x12c] sm:$0xf]
    %v207 = vld [vmem:[#allocation7 + $0x130] sm:$0xf]
    %v208 = vld [vmem:[#allocation7 + $0x134] sm:$0xf]
    %v209 = vld [vmem:[#allocation7 + $0x138] sm:$0xf]
    %v210 = vld [vmem:[#allocation7 + $0x13c] sm:$0xf]
    %v211 = vld [vmem:[#allocation7 + $0x140] sm:$0xf]
    %v212 = vld [vmem:[#allocation7 + $0x144] sm:$0xf]
    %v213 = vld [vmem:[#allocation7 + $0x148] sm:$0xf]
    %v214 = vld [vmem:[#allocation7 + $0x14c] sm:$0xf]
    %v215 = vld [vmem:[#allocation7 + $0x150] sm:$0xf]
    %v216 = vld [vmem:[#allocation7 + $0x154] sm:$0xf]
    %v217 = vld [vmem:[#allocation7 + $0x158] sm:$0xf]
    %v218 = vld [vmem:[#allocation7 + $0x15c] sm:$0xf]
    %v219 = vld [vmem:[#allocation7 + $0x160] sm:$0xf]
    %v220 = vld [vmem:[#allocation7 + $0x164] sm:$0xf]
    %v221 = vld [vmem:[#allocation7 + $0x168] sm:$0xf]
    %v222 = vld [vmem:[#allocation7 + $0x16c] sm:$0xf]
    %v223 = vld [vmem:[#allocation7 + $0x170] sm:$0xf]
    %v224 = vld [vmem:[#allocation7 + $0x174] sm:$0xf]
    %v225 = vld [vmem:[#allocation7 + $0x178] sm:$0xf]
    %v226 = vld [vmem:[#allocation7 + $0x17c] sm:$0xf]
    %v227 = vld [vmem:[#allocation7 + $0x180] sm:$0xf]
    %v228 = vld [vmem:[#allocation7 + $0x184] sm:$0xf]
    %v229 = vld [vmem:[#allocation7 + $0x188] sm:$0xf]
    %v230 = vld [vmem:[#allocation7 + $0x18c] sm:$0xf]
    %v231 = vld [vmem:[#allocation7 + $0x190] sm:$0xf]
    %v232 = vld [vmem:[#allocation7 + $0x194] sm:$0xf]
    %v233 = vld [vmem:[#allocation7 + $0x198] sm:$0xf]
    %v234 = vld [vmem:[#allocation7 + $0x19c] sm:$0xf]
    %v235 = vld [vmem:[#allocation7 + $0x1a0] sm:$0xf]
    %v236 = vld [vmem:[#allocation7 + $0x1a4] sm:$0xf]
    %v237 = vld [vmem:[#allocation7 + $0x1a8] sm:$0xf]
    %v238 = vld [vmem:[#allocation7 + $0x1ac] sm:$0xf]
    %v239 = vld [vmem:[#allocation7 + $0x1b0] sm:$0xf]
    %v240 = vld [vmem:[#allocation7 + $0x1b4] sm:$0xf]
    %v241 = vld [vmem:[#allocation7 + $0x1b8] sm:$0xf]
    %v242 = vld [vmem:[#allocation7 + $0x1bc] sm:$0xf]
    %v243 = vld [vmem:[#allocation7 + $0x1c0] sm:$0xf]
    %v244 = vld [vmem:[#allocation7 + $0x1c4] sm:$0xf]
    %v245 = vld [vmem:[#allocation7 + $0x1c8] sm:$0xf]
    %v246 = vld [vmem:[#allocation7 + $0x1cc] sm:$0xf]
    %v247 = vld [vmem:[#allocation7 + $0x1d0] sm:$0xf]
    %v248 = vld [vmem:[#allocation7 + $0x1d4] sm:$0xf]
    %v249 = vld [vmem:[#allocation7 + $0x1d8] sm:$0xf]
    %v250 = vld [vmem:[#allocation7 + $0x1dc] sm:$0xf]
    %v251 = vld [vmem:[#allocation7 + $0x1e0] sm:$0xf]
    %v252 = vld [vmem:[#allocation7 + $0x1e4] sm:$0xf]
    %v253 = vld [vmem:[#allocation7 + $0x1e8] sm:$0xf]
    %v254 = vld [vmem:[#allocation7 + $0x1ec] sm:$0xf]
    %v255 = vld [vmem:[#allocation7 + $0x1f0] sm:$0xf]
    %v256 = vld [vmem:[#allocation7 + $0x1f4] sm:$0xf]
    %v257 = vld [vmem:[#allocation7 + $0x1f8] sm:$0xf]
    %v258 = vld [vmem:[#allocation7 + $0x1fc] sm:$0xf]
    %v259 = vld [vmem:[%s3] sm:$0x1]
    %v261 = vlaneseq
    %v262 = vshrl.u32 %v261, 7
    %v263 = vsub.s32 0, %v262
    %v264 = vrot.slane %v259, %v263
    %v394 = vunpack.c.l.b16 %v131
    %v395 = vunpack.c.l.b16 %v132
    %v396 = vunpack.c.l.b16 %v133
    %v397 = vunpack.c.l.b16 %v134
    %v398 = vunpack.c.l.b16 %v135
    %v399 = vunpack.c.l.b16 %v136
    %v400 = vunpack.c.l.b16 %v137
    %v401 = vunpack.c.l.b16 %v138
    %v402 = vunpack.c.l.b16 %v139
    %v403 = vunpack.c.l.b16 %v140
    %v404 = vunpack.c.l.b16 %v141
    %v405 = vunpack.c.l.b16 %v142
    %v406 = vunpack.c.l.b16 %v143
    %v407 = vunpack.c.l.b16 %v144
    %v408 = vunpack.c.l.b16 %v145
    %v409 = vunpack.c.l.b16 %v146
    %v410 = vunpack.c.l.b16 %v147
    %v411 = vunpack.c.l.b16 %v148
    %v412 = vunpack.c.l.b16 %v149
    %v413 = vunpack.c.l.b16 %v150
    %v414 = vunpack.c.l.b16 %v151
    %v415 = vunpack.c.l.b16 %v152
    %v416 = vunpack.c.l.b16 %v153
    %v417 = vunpack.c.l.b16 %v154
    %v418 = vunpack.c.l.b16 %v155
    %v419 = vunpack.c.l.b16 %v156
    %v420 = vunpack.c.l.b16 %v157
    %v421 = vunpack.c.l.b16 %v158
    %v422 = vunpack.c.l.b16 %v159
    %v423 = vunpack.c.l.b16 %v160
    %v424 = vunpack.c.l.b16 %v161
    %v425 = vunpack.c.l.b16 %v162
    %v426 = vunpack.c.l.b16 %v163
    %v427 = vunpack.c.l.b16 %v164
    %v428 = vunpack.c.l.b16 %v165
    %v429 = vunpack.c.l.b16 %v166
    %v430 = vunpack.c.l.b16 %v167
    %v431 = vunpack.c.l.b16 %v168
    %v432 = vunpack.c.l.b16 %v169
    %v433 = vunpack.c.l.b16 %v170
    %v434 = vunpack.c.l.b16 %v171
    %v435 = vunpack.c.l.b16 %v172
    %v436 = vunpack.c.l.b16 %v173
    %v437 = vunpack.c.l.b16 %v174
    %v438 = vunpack.c.l.b16 %v175
    %v439 = vunpack.c.l.b16 %v176
    %v440 = vunpack.c.l.b16 %v177
    %v441 = vunpack.c.l.b16 %v178
    %v442 = vunpack.c.l.b16 %v179
    %v443 = vunpack.c.l.b16 %v180
    %v444 = vunpack.c.l.b16 %v181
    %v445 = vunpack.c.l.b16 %v182
    %v446 = vunpack.c.l.b16 %v183
    %v447 = vunpack.c.l.b16 %v184
    %v448 = vunpack.c.l.b16 %v185
    %v449 = vunpack.c.l.b16 %v186
    %v450 = vunpack.c.l.b16 %v187
    %v451 = vunpack.c.l.b16 %v188
    %v452 = vunpack.c.l.b16 %v189
    %v453 = vunpack.c.l.b16 %v190
    %v454 = vunpack.c.l.b16 %v191
    %v455 = vunpack.c.l.b16 %v192
    %v456 = vunpack.c.l.b16 %v193
    %v457 = vunpack.c.l.b16 %v194
    %v458 = vunpack.c.l.b16 %v195
    %v459 = vunpack.c.l.b16 %v196
    %v460 = vunpack.c.l.b16 %v197
    %v461 = vunpack.c.l.b16 %v198
    %v462 = vunpack.c.l.b16 %v199
    %v463 = vunpack.c.l.b16 %v200
    %v464 = vunpack.c.l.b16 %v201
    %v465 = vunpack.c.l.b16 %v202
    %v466 = vunpack.c.l.b16 %v203
    %v467 = vunpack.c.l.b16 %v204
    %v468 = vunpack.c.l.b16 %v205
    %v469 = vunpack.c.l.b16 %v206
    %v470 = vunpack.c.l.b16 %v207
    %v471 = vunpack.c.l.b16 %v208
    %v472 = vunpack.c.l.b16 %v209
    %v473 = vunpack.c.l.b16 %v210
    %v474 = vunpack.c.l.b16 %v211
    %v475 = vunpack.c.l.b16 %v212
    %v476 = vunpack.c.l.b16 %v213
    %v477 = vunpack.c.l.b16 %v214
    %v478 = vunpack.c.l.b16 %v215
    %v479 = vunpack.c.l.b16 %v216
    %v480 = vunpack.c.l.b16 %v217
    %v481 = vunpack.c.l.b16 %v218
    %v482 = vunpack.c.l.b16 %v219
    %v483 = vunpack.c.l.b16 %v220
    %v484 = vunpack.c.l.b16 %v221
    %v485 = vunpack.c.l.b16 %v222
    %v486 = vunpack.c.l.b16 %v223
    %v487 = vunpack.c.l.b16 %v224
    %v488 = vunpack.c.l.b16 %v225
    %v489 = vunpack.c.l.b16 %v226
    %v490 = vunpack.c.l.b16 %v227
    %v491 = vunpack.c.l.b16 %v228
    %v492 = vunpack.c.l.b16 %v229
    %v493 = vunpack.c.l.b16 %v230
    %v494 = vunpack.c.l.b16 %v231
    %v495 = vunpack.c.l.b16 %v232
    %v496 = vunpack.c.l.b16 %v233
    %v497 = vunpack.c.l.b16 %v234
    %v498 = vunpack.c.l.b16 %v235
    %v499 = vunpack.c.l.b16 %v236
    %v500 = vunpack.c.l.b16 %v237
    %v501 = vunpack.c.l.b16 %v238
    %v502 = vunpack.c.l.b16 %v239
    %v503 = vunpack.c.l.b16 %v240
    %v504 = vunpack.c.l.b16 %v241
    %v505 = vunpack.c.l.b16 %v242
    %v506 = vunpack.c.l.b16 %v243
    %v507 = vunpack.c.l.b16 %v244
    %v508 = vunpack.c.l.b16 %v245
    %v509 = vunpack.c.l.b16 %v246
    %v510 = vunpack.c.l.b16 %v247
    %v511 = vunpack.c.l.b16 %v248
    %v512 = vunpack.c.l.b16 %v249
    %v513 = vunpack.c.l.b16 %v250
    %v514 = vunpack.c.l.b16 %v251
    %v515 = vunpack.c.l.b16 %v252
    %v516 = vunpack.c.l.b16 %v253
    %v517 = vunpack.c.l.b16 %v254
    %v518 = vunpack.c.l.b16 %v255
    %v519 = vunpack.c.l.b16 %v256
    %v520 = vunpack.c.l.b16 %v257
    %v521 = vunpack.c.l.b16 %v258
    %v522 = vpack.c.b16 %v395, %v394
    %v523 = vpack.c.b16 %v397, %v396
    %v524 = vpack.c.b16 %v399, %v398
    %v525 = vpack.c.b16 %v401, %v400
    %v526 = vpack.c.b16 %v403, %v402
    %v527 = vpack.c.b16 %v405, %v404
    %v528 = vpack.c.b16 %v407, %v406
    %v529 = vpack.c.b16 %v409, %v408
    %v530 = vpack.c.b16 %v411, %v410
    %v531 = vpack.c.b16 %v413, %v412
    %v532 = vpack.c.b16 %v415, %v414
    %v533 = vpack.c.b16 %v417, %v416
    %v534 = vpack.c.b16 %v419, %v418
    %v535 = vpack.c.b16 %v421, %v420
    %v536 = vpack.c.b16 %v423, %v422
    %v537 = vpack.c.b16 %v425, %v424
    %v538 = vpack.c.b16 %v427, %v426
    %v539 = vpack.c.b16 %v429, %v428
    %v540 = vpack.c.b16 %v431, %v430
    %v541 = vpack.c.b16 %v433, %v432
    %v542 = vpack.c.b16 %v435, %v434
    %v543 = vpack.c.b16 %v437, %v436
    %v544 = vpack.c.b16 %v439, %v438
    %v545 = vpack.c.b16 %v441, %v440
    %v546 = vpack.c.b16 %v443, %v442
    %v547 = vpack.c.b16 %v445, %v444
    %v548 = vpack.c.b16 %v447, %v446
    %v549 = vpack.c.b16 %v449, %v448
    %v550 = vpack.c.b16 %v451, %v450
    %v551 = vpack.c.b16 %v453, %v452
    %v552 = vpack.c.b16 %v455, %v454
    %v553 = vpack.c.b16 %v457, %v456
    %v554 = vpack.c.b16 %v459, %v458
    %v555 = vpack.c.b16 %v461, %v460
    %v556 = vpack.c.b16 %v463, %v462
    %v557 = vpack.c.b16 %v465, %v464
    %v558 = vpack.c.b16 %v467, %v466
    %v559 = vpack.c.b16 %v469, %v468
    %v560 = vpack.c.b16 %v471, %v470
    %v561 = vpack.c.b16 %v473, %v472
    %v562 = vpack.c.b16 %v475, %v474
    %v563 = vpack.c.b16 %v477, %v476
    %v564 = vpack.c.b16 %v479, %v478
    %v565 = vpack.c.b16 %v481, %v480
    %v566 = vpack.c.b16 %v483, %v482
    %v567 = vpack.c.b16 %v485, %v484
    %v568 = vpack.c.b16 %v487, %v486
    %v569 = vpack.c.b16 %v489, %v488
    %v570 = vpack.c.b16 %v491, %v490
    %v571 = vpack.c.b16 %v493, %v492
    %v572 = vpack.c.b16 %v495, %v494
    %v573 = vpack.c.b16 %v497, %v496
    %v574 = vpack.c.b16 %v499, %v498
    %v575 = vpack.c.b16 %v501, %v500
    %v576 = vpack.c.b16 %v503, %v502
    %v577 = vpack.c.b16 %v505, %v504
    %v578 = vpack.c.b16 %v507, %v506
    %v579 = vpack.c.b16 %v509, %v508
    %v580 = vpack.c.b16 %v511, %v510
    %v581 = vpack.c.b16 %v513, %v512
    %v582 = vpack.c.b16 %v515, %v514
    %v583 = vpack.c.b16 %v517, %v516
    %v584 = vpack.c.b16 %v519, %v518
    %v585 = vpack.c.b16 %v521, %v520
    %650 = vmatprep.subr.bf16.mxu0 0
    %651 = vmatpush1.bf16.msra.mxu0 %v529
    %652 = vmatprep.subr.bf16.mxu0 0
    %653 = vmatpush1.bf16.msra.mxu0 %v528
    %654 = vmatprep.subr.bf16.mxu0 0
    %655 = vmatpush1.bf16.msra.mxu0 %v527
    %656 = vmatprep.subr.bf16.mxu0 0
    %657 = vmatpush1.bf16.msra.mxu0 %v526
    %658 = vmatprep.subr.bf16.mxu0 0
    %659 = vmatpush1.bf16.msra.mxu0 %v525
    %660 = vmatprep.subr.bf16.mxu0 0
    %661 = vmatpush1.bf16.msra.mxu0 %v524
    %662 = vmatprep.subr.bf16.mxu0 0
    %663 = vmatpush1.bf16.msra.mxu0 %v523
    %664 = vmatprep.subr.bf16.mxu0 0
    %665 = vmatpush1.bf16.msra.mxu0 %v522
    %666 = vmatprep.subr.bf16.mxu0 0
    %667 = vmatpush2.bf16.msra.mxu0 %v537
    %668 = vmatprep.subr.bf16.mxu0 0
    %669 = vmatpush2.bf16.msra.mxu0 %v536
    %670 = vmatprep.subr.bf16.mxu0 0
    %671 = vmatpush2.bf16.msra.mxu0 %v535
    %672 = vmatprep.subr.bf16.mxu0 0
    %673 = vmatpush2.bf16.msra.mxu0 %v534
    %674 = vmatprep.subr.bf16.mxu0 0
    %675 = vmatpush2.bf16.msra.mxu0 %v533
    %676 = vmatprep.subr.bf16.mxu0 0
    %677 = vmatpush2.bf16.msra.mxu0 %v532
    %678 = vmatprep.subr.bf16.mxu0 0
    %679 = vmatpush2.bf16.msra.mxu0 %v531
    %680 = vmatprep.subr.bf16.mxu0 0
    %681 = vmatpush2.bf16.msra.mxu0 %v530
    %682 = vmatprep.mubr.bf16.mxu0 %v124
    %683 = vmatmul.mubr.bf16.gmra.mxu0 %v123
    %v684 = vpop.f32.mrf.mxu0
    %v685 = vadd.f32 %v264, %v684
    %v686 = vpop.f32.mrf.mxu0
    %v687 = vpop.f32.mrf.mxu0
    %v688 = vpop.f32.mrf.mxu0
    %689 = vdwg.mxu0
    %690 = vmatprep.subr.bf16.mxu0 0
    %691 = vmatpush1.bf16.msra.mxu0 %v545
    %692 = vmatprep.subr.bf16.mxu0 0
    %693 = vmatpush1.bf16.msra.mxu0 %v544
    %694 = vmatprep.subr.bf16.mxu0 0
    %695 = vmatpush1.bf16.msra.mxu0 %v543
    %696 = vmatprep.subr.bf16.mxu0 0
    %697 = vmatpush1.bf16.msra.mxu0 %v542
    %698 = vmatprep.subr.bf16.mxu0 0
    %699 = vmatpush1.bf16.msra.mxu0 %v541
    %700 = vmatprep.subr.bf16.mxu0 0
    %701 = vmatpush1.bf16.msra.mxu0 %v540
    %702 = vmatprep.subr.bf16.mxu0 0
    %703 = vmatpush1.bf16.msra.mxu0 %v539
    %704 = vmatprep.subr.bf16.mxu0 0
    %705 = vmatpush1.bf16.msra.mxu0 %v538
    %706 = vmatprep.subr.bf16.mxu0 0
    %707 = vmatpush2.bf16.msra.mxu0 %v553
    %708 = vmatprep.subr.bf16.mxu0 0
    %709 = vmatpush2.bf16.msra.mxu0 %v552
    %710 = vmatprep.subr.bf16.mxu0 0
    %711 = vmatpush2.bf16.msra.mxu0 %v551
    %712 = vmatprep.subr.bf16.mxu0 0
    %713 = vmatpush2.bf16.msra.mxu0 %v550
    %714 = vmatprep.subr.bf16.mxu0 0
    %715 = vmatpush2.bf16.msra.mxu0 %v549
    %716 = vmatprep.subr.bf16.mxu0 0
    %717 = vmatpush2.bf16.msra.mxu0 %v548
    %718 = vmatprep.subr.bf16.mxu0 0
    %719 = vmatpush2.bf16.msra.mxu0 %v547
    %720 = vmatprep.subr.bf16.mxu0 0
    %721 = vmatpush2.bf16.msra.mxu0 %v546
    %722 = vmatprep.mubr.bf16.mxu0 %v126
    %723 = vmatmul.mubr.bf16.gmra.mxu0 %v125
    %v724 = vpop.f32.mrf.mxu0
    %v725 = vadd.f32 %v685, %v724
    %v726 = vpop.f32.mrf.mxu0
    %v727 = vpop.f32.mrf.mxu0
    %v728 = vpop.f32.mrf.mxu0
    %729 = vdwg.mxu0
    %730 = vmatprep.subr.bf16.mxu0 0
    %731 = vmatpush1.bf16.msra.mxu0 %v561
    %732 = vmatprep.subr.bf16.mxu0 0
    %733 = vmatpush1.bf16.msra.mxu0 %v560
    %734 = vmatprep.subr.bf16.mxu0 0
    %735 = vmatpush1.bf16.msra.mxu0 %v559
    %736 = vmatprep.subr.bf16.mxu0 0
    %737 = vmatpush1.bf16.msra.mxu0 %v558
    %738 = vmatprep.subr.bf16.mxu0 0
    %739 = vmatpush1.bf16.msra.mxu0 %v557
    %740 = vmatprep.subr.bf16.mxu0 0
    %741 = vmatpush1.bf16.msra.mxu0 %v556
    %742 = vmatprep.subr.bf16.mxu0 0
    %743 = vmatpush1.bf16.msra.mxu0 %v555
    %744 = vmatprep.subr.bf16.mxu0 0
    %745 = vmatpush1.bf16.msra.mxu0 %v554
    %746 = vmatprep.subr.bf16.mxu0 0
    %747 = vmatpush2.bf16.msra.mxu0 %v569
    %748 = vmatprep.subr.bf16.mxu0 0
    %749 = vmatpush2.bf16.msra.mxu0 %v568
    %750 = vmatprep.subr.bf16.mxu0 0
    %751 = vmatpush2.bf16.msra.mxu0 %v567
    %752 = vmatprep.subr.bf16.mxu0 0
    %753 = vmatpush2.bf16.msra.mxu0 %v566
    %754 = vmatprep.subr.bf16.mxu0 0
    %755 = vmatpush2.bf16.msra.mxu0 %v565
    %756 = vmatprep.subr.bf16.mxu0 0
    %757 = vmatpush2.bf16.msra.mxu0 %v564
    %758 = vmatprep.subr.bf16.mxu0 0
    %759 = vmatpush2.bf16.msra.mxu0 %v563
    %760 = vmatprep.subr.bf16.mxu0 0
    %761 = vmatpush2.bf16.msra.mxu0 %v562
    %762 = vmatprep.mubr.bf16.mxu0 %v128
    %763 = vmatmul.mubr.bf16.gmra.mxu0 %v127
    %v764 = vpop.f32.mrf.mxu0
    %v765 = vadd.f32 %v725, %v764
    %v766 = vpop.f32.mrf.mxu0
    %v767 = vpop.f32.mrf.mxu0
    %v768 = vpop.f32.mrf.mxu0
    %769 = vdwg.mxu0
    %770 = vmatprep.subr.bf16.mxu0 0
    %771 = vmatpush1.bf16.msra.mxu0 %v577
    %772 = vmatprep.subr.bf16.mxu0 0
    %773 = vmatpush1.bf16.msra.mxu0 %v576
    %774 = vmatprep.subr.bf16.mxu0 0
    %775 = vmatpush1.bf16.msra.mxu0 %v575
    %776 = vmatprep.subr.bf16.mxu0 0
    %777 = vmatpush1.bf16.msra.mxu0 %v574
    %778 = vmatprep.subr.bf16.mxu0 0
    %779 = vmatpush1.bf16.msra.mxu0 %v573
    %780 = vmatprep.subr.bf16.mxu0 0
    %781 = vmatpush1.bf16.msra.mxu0 %v572
    %782 = vmatprep.subr.bf16.mxu0 0
    %783 = vmatpush1.bf16.msra.mxu0 %v571
    %784 = vmatprep.subr.bf16.mxu0 0
    %785 = vmatpush1.bf16.msra.mxu0 %v570
    %786 = vmatprep.subr.bf16.mxu0 0
    %787 = vmatpush2.bf16.msra.mxu0 %v585
    %788 = vmatprep.subr.bf16.mxu0 0
    %789 = vmatpush2.bf16.msra.mxu0 %v584
    %790 = vmatprep.subr.bf16.mxu0 0
    %791 = vmatpush2.bf16.msra.mxu0 %v583
    %792 = vmatprep.subr.bf16.mxu0 0
    %793 = vmatpush2.bf16.msra.mxu0 %v582
    %794 = vmatprep.subr.bf16.mxu0 0
    %795 = vmatpush2.bf16.msra.mxu0 %v581
    %796 = vmatprep.subr.bf16.mxu0 0
    %797 = vmatpush2.bf16.msra.mxu0 %v580
    %798 = vmatprep.subr.bf16.mxu0 0
    %799 = vmatpush2.bf16.msra.mxu0 %v579
    %800 = vmatprep.subr.bf16.mxu0 0
    %801 = vmatpush2.bf16.msra.mxu0 %v578
    %802 = vmatprep.mubr.bf16.mxu0 %v130
    %803 = vmatmul.mubr.bf16.gmra.mxu0 %v129
    %v804 = vpop.f32.mrf.mxu0
    %v805 = vadd.f32 %v765, %v804
    %v806 = vpop.f32.mrf.mxu0
    %v807 = vpop.f32.mrf.mxu0
    %v808 = vpop.f32.mrf.mxu0
    %809 = vdwg.mxu0
    %v810 = vmax.f32 %v805, 0.0
    %v811 = vpack.c.bf16 %v810, %v810
    %v812 = vld [vmem:[#allocation8] sm:$0xff]
    %v813 = vld [vmem:[#allocation8 + $0x8] sm:$0xff]
    %v814 = vld [vmem:[#allocation8 + $0x10] sm:$0xff]
    %v815 = vld [vmem:[#allocation8 + $0x18] sm:$0xff]
    %v816 = vld [vmem:[#allocation8 + $0x20] sm:$0xff]
    %v817 = vld [vmem:[#allocation8 + $0x28] sm:$0xff]
    %v818 = vld [vmem:[#allocation8 + $0x30] sm:$0xff]
    %v819 = vld [vmem:[#allocation8 + $0x38] sm:$0xff]
    %v820 = vld [vmem:[#allocation8 + $0x40] sm:$0xff]
    %v821 = vld [vmem:[#allocation8 + $0x48] sm:$0xff]
    %v822 = vld [vmem:[#allocation8 + $0x50] sm:$0xff]
    %v823 = vld [vmem:[#allocation8 + $0x58] sm:$0xff]
    %v824 = vld [vmem:[#allocation8 + $0x60] sm:$0xff]
    %v825 = vld [vmem:[#allocation8 + $0x68] sm:$0xff]
    %v826 = vld [vmem:[#allocation8 + $0x70] sm:$0xff]
    %v827 = vld [vmem:[#allocation8 + $0x78] sm:$0xff]
    %v828 = vld [vmem:[%s5] sm:$0x3]
    %v830 = vlaneseq
    %v831 = vshrl.u32 %v830, 7
    %v832 = vsub.s32 0, %v831
    %v833 = vrot.slane %v828, %v832
    %v834 = vlaneseq
    %v835 = vshrl.u32 %v834, 7
    %v836 = vsub.s32 1, %v835
    %v837 = vrot.slane %v828, %v836
    %v856 = vunpack.c.l.b16 %v812
    %v857 = vunpack.c.h.b16 %v812
    %v858 = vunpack.c.l.b16 %v813
    %v859 = vunpack.c.h.b16 %v813
    %v860 = vunpack.c.l.b16 %v814
    %v861 = vunpack.c.h.b16 %v814
    %v862 = vunpack.c.l.b16 %v815
    %v863 = vunpack.c.h.b16 %v815
    %v864 = vunpack.c.l.b16 %v816
    %v865 = vunpack.c.h.b16 %v816
    %v866 = vunpack.c.l.b16 %v817
    %v867 = vunpack.c.h.b16 %v817
    %v868 = vunpack.c.l.b16 %v818
    %v869 = vunpack.c.h.b16 %v818
    %v870 = vunpack.c.l.b16 %v819
    %v871 = vunpack.c.h.b16 %v819
    %v872 = vunpack.c.l.b16 %v820
    %v873 = vunpack.c.h.b16 %v820
    %v874 = vunpack.c.l.b16 %v821
    %v875 = vunpack.c.h.b16 %v821
    %v876 = vunpack.c.l.b16 %v822
    %v877 = vunpack.c.h.b16 %v822
    %v878 = vunpack.c.l.b16 %v823
    %v879 = vunpack.c.h.b16 %v823
    %v880 = vunpack.c.l.b16 %v824
    %v881 = vunpack.c.h.b16 %v824
    %v882 = vunpack.c.l.b16 %v825
    %v883 = vunpack.c.h.b16 %v825
    %v884 = vunpack.c.l.b16 %v826
    %v885 = vunpack.c.h.b16 %v826
    %v886 = vunpack.c.l.b16 %v827
    %v887 = vunpack.c.h.b16 %v827
    %v888 = vpack.c.b16 %v858, %v856
    %v889 = vpack.c.b16 %v859, %v857
    %v890 = vpack.c.b16 %v862, %v860
    %v891 = vpack.c.b16 %v863, %v861
    %v892 = vpack.c.b16 %v866, %v864
    %v893 = vpack.c.b16 %v867, %v865
    %v894 = vpack.c.b16 %v870, %v868
    %v895 = vpack.c.b16 %v871, %v869
    %v896 = vpack.c.b16 %v874, %v872
    %v897 = vpack.c.b16 %v875, %v873
    %v898 = vpack.c.b16 %v878, %v876
    %v899 = vpack.c.b16 %v879, %v877
    %v900 = vpack.c.b16 %v882, %v880
    %v901 = vpack.c.b16 %v883, %v881
    %v902 = vpack.c.b16 %v886, %v884
    %v903 = vpack.c.b16 %v887, %v885
    %920 = vmatprep.subr.bf16.mxu0 %v903
    %921 = vmatpush1.bf16.msra.mxu0 %v902
    %922 = vmatprep.subr.bf16.mxu0 %v901
    %923 = vmatpush1.bf16.msra.mxu0 %v900
    %924 = vmatprep.subr.bf16.mxu0 %v899
    %925 = vmatpush1.bf16.msra.mxu0 %v898
    %926 = vmatprep.subr.bf16.mxu0 %v897
    %927 = vmatpush1.bf16.msra.mxu0 %v896
    %928 = vmatprep.subr.bf16.mxu0 %v895
    %929 = vmatpush1.bf16.msra.mxu0 %v894
    %930 = vmatprep.subr.bf16.mxu0 %v893
    %931 = vmatpush1.bf16.msra.mxu0 %v892
    %932 = vmatprep.subr.bf16.mxu0 %v891
    %933 = vmatpush1.bf16.msra.mxu0 %v890
    %934 = vmatprep.subr.bf16.mxu0 %v889
    %935 = vmatpush1.bf16.msra.mxu0 %v888
    %936 = vmatprep.subr.bf16.mxu0 0
    %937 = vmatpush2.bf16.msra.mxu0 0
    %938 = vmatprep.subr.bf16.mxu0 0
    %939 = vmatpush2.bf16.msra.mxu0 0
    %940 = vmatprep.subr.bf16.mxu0 0
    %941 = vmatpush2.bf16.msra.mxu0 0
    %942 = vmatprep.subr.bf16.mxu0 0
    %943 = vmatpush2.bf16.msra.mxu0 0
    %944 = vmatprep.subr.bf16.mxu0 0
    %945 = vmatpush2.bf16.msra.mxu0 0
    %946 = vmatprep.subr.bf16.mxu0 0
    %947 = vmatpush2.bf16.msra.mxu0 0
    %948 = vmatprep.subr.bf16.mxu0 0
    %949 = vmatpush2.bf16.msra.mxu0 0
    %950 = vmatprep.subr.bf16.mxu0 0
    %951 = vmatpush2.bf16.msra.mxu0 0
    %952 = vmatprep.mubr.bf16.mxu0 0
    %953 = vmatmul.mubr.bf16.gmra.mxu0 %v811
    %v954 = vpop.f32.mrf.mxu0
    %v955 = vadd.f32 %v833, %v954
    %v956 = vpop.f32.mrf.mxu0
    %v957 = vadd.f32 %v837, %v956
    %v958 = vpop.f32.mrf.mxu0
    %v959 = vpop.f32.mrf.mxu0
    %960 = vdwg.mxu0
    %v961 = vld [vmem:[#allocation5] sm:$0xff]
    %v962 = vld [vmem:[#allocation5 + $0x8] sm:$0xff]
    %v963 = vadd.f32 %v955, %v961
    %v964 = vadd.f32 %v957, %v962
    %965 = vmax.xlane.f32.xlu0 %v963
    %v966 = vpop.xlane.xlu0 %965
    %v967 = vsub.f32 %v963, %v966
    %v968 = vmul.f32 %v967, 1.442695
    %v969 = vpow.pop %v968
    %970 = vadd.xlane.f32.xlu0 %v969
    %v971 = vpop.xlane.xlu0 %970
    %v972 = vrcp.pop %v971
    %v973 = vmul.f32 %v969, %v972
    %974 = vmax.xlane.f32.xlu0 %v964
    %v975 = vpop.xlane.xlu0 %974
    %v976 = vsub.f32 %v964, %v975
    %v977 = vmul.f32 %v976, 1.442695
    %v978 = vpow.pop %v977
    %979 = vadd.xlane.f32.xlu0 %v978
    %v980 = vpop.xlane.xlu0 %979
    %v981 = vrcp.pop %v980
    %v982 = vmul.f32 %v978, %v981
    %v983 = vpack.c.bf16 %v973, %v973
    %v984 = vpack.c.bf16 %v982, %v982
    %v985 = vld [vmem:[#allocation10] sm:$0xf]
    %v986 = vld [vmem:[#allocation10 + $0x4] sm:$0xf]
    %v987 = vld [vmem:[#allocation10 + $0x8] sm:$0xf]
    %v988 = vld [vmem:[#allocation10 + $0xc] sm:$0xf]
    %v989 = vld [vmem:[#allocation10 + $0x10] sm:$0xf]
    %v990 = vld [vmem:[#allocation10 + $0x14] sm:$0xf]
    %v991 = vld [vmem:[#allocation10 + $0x18] sm:$0xf]
    %v992 = vld [vmem:[#allocation10 + $0x1c] sm:$0xf]
    %v993 = vld [vmem:[#allocation10 + $0x20] sm:$0xf]
    %v994 = vld [vmem:[#allocation10 + $0x24] sm:$0xf]
    %v995 = vld [vmem:[#allocation10 + $0x28] sm:$0xf]
    %v996 = vld [vmem:[#allocation10 + $0x2c] sm:$0xf]
    %v997 = vld [vmem:[#allocation10 + $0x30] sm:$0xf]
    %v998 = vld [vmem:[#allocation10 + $0x34] sm:$0xf]
    %v999 = vld [vmem:[#allocation10 + $0x38] sm:$0xf]
    %v1000 = vld [vmem:[#allocation10 + $0x3c] sm:$0xf]
    %v1001 = vld [vmem:[#allocation10 + $0x40] sm:$0xf]
    %v1002 = vld [vmem:[#allocation10 + $0x44] sm:$0xf]
    %v1003 = vld [vmem:[#allocation10 + $0x48] sm:$0xf]
    %v1004 = vld [vmem:[#allocation10 + $0x4c] sm:$0xf]
    %v1005 = vld [vmem:[#allocation10 + $0x50] sm:$0xf]
    %v1006 = vld [vmem:[#allocation10 + $0x54] sm:$0xf]
    %v1007 = vld [vmem:[#allocation10 + $0x58] sm:$0xf]
    %v1008 = vld [vmem:[#allocation10 + $0x5c] sm:$0xf]
    %v1009 = vld [vmem:[#allocation10 + $0x60] sm:$0xf]
    %v1010 = vld [vmem:[#allocation10 + $0x64] sm:$0xf]
    %v1011 = vld [vmem:[#allocation10 + $0x68] sm:$0xf]
    %v1012 = vld [vmem:[#allocation10 + $0x6c] sm:$0xf]
    %v1013 = vld [vmem:[#allocation10 + $0x70] sm:$0xf]
    %v1014 = vld [vmem:[#allocation10 + $0x74] sm:$0xf]
    %v1015 = vld [vmem:[#allocation10 + $0x78] sm:$0xf]
    %v1016 = vld [vmem:[#allocation10 + $0x7c] sm:$0xf]
    %v1017 = vld [vmem:[%s7] sm:$0x1]
    %v1019 = vlaneseq
    %v1020 = vshrl.u32 %v1019, 7
    %v1021 = vsub.s32 0, %v1020
    %v1022 = vrot.slane %v1017, %v1021
    %v1056 = vunpack.c.l.b16 %v985
    %v1057 = vunpack.c.l.b16 %v986
    %v1058 = vunpack.c.l.b16 %v987
    %v1059 = vunpack.c.l.b16 %v988
    %v1060 = vunpack.c.l.b16 %v989
    %v1061 = vunpack.c.l.b16 %v990
    %v1062 = vunpack.c.l.b16 %v991
    %v1063 = vunpack.c.l.b16 %v992
    %v1064 = vunpack.c.l.b16 %v993
    %v1065 = vunpack.c.l.b16 %v994
    %v1066 = vunpack.c.l.b16 %v995
    %v1067 = vunpack.c.l.b16 %v996
    %v1068 = vunpack.c.l.b16 %v997
    %v1069 = vunpack.c.l.b16 %v998
    %v1070 = vunpack.c.l.b16 %v999
    %v1071 = vunpack.c.l.b16 %v1000
    %v1072 = vunpack.c.l.b16 %v1001
    %v1073 = vunpack.c.l.b16 %v1002
    %v1074 = vunpack.c.l.b16 %v1003
    %v1075 = vunpack.c.l.b16 %v1004
    %v1076 = vunpack.c.l.b16 %v1005
    %v1077 = vunpack.c.l.b16 %v1006
    %v1078 = vunpack.c.l.b16 %v1007
    %v1079 = vunpack.c.l.b16 %v1008
    %v1080 = vunpack.c.l.b16 %v1009
    %v1081 = vunpack.c.l.b16 %v1010
    %v1082 = vunpack.c.l.b16 %v1011
    %v1083 = vunpack.c.l.b16 %v1012
    %v1084 = vunpack.c.l.b16 %v1013
    %v1085 = vunpack.c.l.b16 %v1014
    %v1086 = vunpack.c.l.b16 %v1015
    %v1087 = vunpack.c.l.b16 %v1016
    %v1088 = vpack.c.b16 %v1057, %v1056
    %v1089 = vpack.c.b16 %v1059, %v1058
    %v1090 = vpack.c.b16 %v1061, %v1060
    %v1091 = vpack.c.b16 %v1063, %v1062
    %v1092 = vpack.c.b16 %v1065, %v1064
    %v1093 = vpack.c.b16 %v1067, %v1066
    %v1094 = vpack.c.b16 %v1069, %v1068
    %v1095 = vpack.c.b16 %v1071, %v1070
    %v1096 = vpack.c.b16 %v1073, %v1072
    %v1097 = vpack.c.b16 %v1075, %v1074
    %v1098 = vpack.c.b16 %v1077, %v1076
    %v1099 = vpack.c.b16 %v1079, %v1078
    %v1100 = vpack.c.b16 %v1081, %v1080
    %v1101 = vpack.c.b16 %v1083, %v1082
    %v1102 = vpack.c.b16 %v1085, %v1084
    %v1103 = vpack.c.b16 %v1087, %v1086
    %1120 = vmatprep.subr.bf16.mxu0 0
    %1121 = vmatpush1.bf16.msra.mxu0 %v1095
    %1122 = vmatprep.subr.bf16.mxu0 0
    %1123 = vmatpush1.bf16.msra.mxu0 %v1094
    %1124 = vmatprep.subr.bf16.mxu0 0
    %1125 = vmatpush1.bf16.msra.mxu0 %v1093
    %1126 = vmatprep.subr.bf16.mxu0 0
    %1127 = vmatpush1.bf16.msra.mxu0 %v1092
    %1128 = vmatprep.subr.bf16.mxu0 0
    %1129 = vmatpush1.bf16.msra.mxu0 %v1091
    %1130 = vmatprep.subr.bf16.mxu0 0
    %1131 = vmatpush1.bf16.msra.mxu0 %v1090
    %1132 = vmatprep.subr.bf16.mxu0 0
    %1133 = vmatpush1.bf16.msra.mxu0 %v1089
    %1134 = vmatprep.subr.bf16.mxu0 0
    %1135 = vmatpush1.bf16.msra.mxu0 %v1088
    %1136 = vmatprep.subr.bf16.mxu0 0
    %1137 = vmatpush2.bf16.msra.mxu0 %v1103
    %1138 = vmatprep.subr.bf16.mxu0 0
    %1139 = vmatpush2.bf16.msra.mxu0 %v1102
    %1140 = vmatprep.subr.bf16.mxu0 0
    %1141 = vmatpush2.bf16.msra.mxu0 %v1101
    %1142 = vmatprep.subr.bf16.mxu0 0
    %1143 = vmatpush2.bf16.msra.mxu0 %v1100
    %1144 = vmatprep.subr.bf16.mxu0 0
    %1145 = vmatpush2.bf16.msra.mxu0 %v1099
    %1146 = vmatprep.subr.bf16.mxu0 0
    %1147 = vmatpush2.bf16.msra.mxu0 %v1098
    %1148 = vmatprep.subr.bf16.mxu0 0
    %1149 = vmatpush2.bf16.msra.mxu0 %v1097
    %1150 = vmatprep.subr.bf16.mxu0 0
    %1151 = vmatpush2.bf16.msra.mxu0 %v1096
    %1152 = vmatprep.mubr.bf16.mxu0 %v984
    %1153 = vmatmul.mubr.bf16.gmra.mxu0 %v983
    %v1154 = vpop.f32.mrf.mxu0
    %v1155 = vadd.f32 %v1022, %v1154
    %v1156 = vpop.f32.mrf.mxu0
    %v1157 = vpop.f32.mrf.mxu0
    %v1158 = vpop.f32.mrf.mxu0
    %1159 = vdwg.mxu0
    %v1160 = vmax.f32 %v1155, 0.0
    %v1161 = vpack.c.bf16 %v1160, %v1160
    %v1162 = vld [vmem:[#allocation11] sm:$0xff]
    %v1163 = vld [vmem:[#allocation11 + $0x8] sm:$0xff]
    %v1164 = vld [vmem:[#allocation11 + $0x10] sm:$0xff]
    %v1165 = vld [vmem:[#allocation11 + $0x18] sm:$0xff]
    %v1166 = vld [vmem:[#allocation11 + $0x20] sm:$0xff]
    %v1167 = vld [vmem:[#allocation11 + $0x28] sm:$0xff]
    %v1168 = vld [vmem:[#allocation11 + $0x30] sm:$0xff]
    %v1169 = vld [vmem:[#allocation11 + $0x38] sm:$0xff]
    %v1170 = vld [vmem:[#allocation11 + $0x40] sm:$0xff]
    %v1171 = vld [vmem:[#allocation11 + $0x48] sm:$0xff]
    %v1172 = vld [vmem:[#allocation11 + $0x50] sm:$0xff]
    %v1173 = vld [vmem:[#allocation11 + $0x58] sm:$0xff]
    %v1174 = vld [vmem:[#allocation11 + $0x60] sm:$0xff]
    %v1175 = vld [vmem:[#allocation11 + $0x68] sm:$0xff]
    %v1176 = vld [vmem:[#allocation11 + $0x70] sm:$0xff]
    %v1177 = vld [vmem:[#allocation11 + $0x78] sm:$0xff]
    %v1178 = vld [vmem:[#allocation11 + $0x80] sm:$0xff]
    %v1179 = vld [vmem:[#allocation11 + $0x88] sm:$0xff]
    %v1180 = vld [vmem:[#allocation11 + $0x90] sm:$0xff]
    %v1181 = vld [vmem:[#allocation11 + $0x98] sm:$0xff]
    %v1182 = vld [vmem:[#allocation11 + $0xa0] sm:$0xff]
    %v1183 = vld [vmem:[#allocation11 + $0xa8] sm:$0xff]
    %v1184 = vld [vmem:[#allocation11 + $0xb0] sm:$0xff]
    %v1185 = vld [vmem:[#allocation11 + $0xb8] sm:$0xff]
    %v1186 = vld [vmem:[#allocation11 + $0xc0] sm:$0xff]
    %v1187 = vld [vmem:[#allocation11 + $0xc8] sm:$0xff]
    %v1188 = vld [vmem:[#allocation11 + $0xd0] sm:$0xff]
    %v1189 = vld [vmem:[#allocation11 + $0xd8] sm:$0xff]
    %v1190 = vld [vmem:[#allocation11 + $0xe0] sm:$0xff]
    %v1191 = vld [vmem:[#allocation11 + $0xe8] sm:$0xff]
    %v1192 = vld [vmem:[#allocation11 + $0xf0] sm:$0xff]
    %v1193 = vld [vmem:[#allocation11 + $0xf8] sm:$0xff]
    %v1194 = vld [vmem:[#allocation11 + $0x100] sm:$0xff]
    %v1195 = vld [vmem:[#allocation11 + $0x108] sm:$0xff]
    %v1196 = vld [vmem:[#allocation11 + $0x110] sm:$0xff]
    %v1197 = vld [vmem:[#allocation11 + $0x118] sm:$0xff]
    %v1198 = vld [vmem:[#allocation11 + $0x120] sm:$0xff]
    %v1199 = vld [vmem:[#allocation11 + $0x128] sm:$0xff]
    %v1200 = vld [vmem:[#allocation11 + $0x130] sm:$0xff]
    %v1201 = vld [vmem:[#allocation11 + $0x138] sm:$0xff]
    %v1202 = vld [vmem:[#allocation11 + $0x140] sm:$0xff]
    %v1203 = vld [vmem:[#allocation11 + $0x148] sm:$0xff]
    %v1204 = vld [vmem:[#allocation11 + $0x150] sm:$0xff]
    %v1205 = vld [vmem:[#allocation11 + $0x158] sm:$0xff]
    %v1206 = vld [vmem:[#allocation11 + $0x160] sm:$0xff]
    %v1207 = vld [vmem:[#allocation11 + $0x168] sm:$0xff]
    %v1208 = vld [vmem:[#allocation11 + $0x170] sm:$0xff]
    %v1209 = vld [vmem:[#allocation11 + $0x178] sm:$0xff]
    %v1210 = vld [vmem:[#allocation11 + $0x180] sm:$0xff]
    %v1211 = vld [vmem:[#allocation11 + $0x188] sm:$0xff]
    %v1212 = vld [vmem:[#allocation11 + $0x190] sm:$0xff]
    %v1213 = vld [vmem:[#allocation11 + $0x198] sm:$0xff]
    %v1214 = vld [vmem:[#allocation11 + $0x1a0] sm:$0xff]
    %v1215 = vld [vmem:[#allocation11 + $0x1a8] sm:$0xff]
    %v1216 = vld [vmem:[#allocation11 + $0x1b0] sm:$0xff]
    %v1217 = vld [vmem:[#allocation11 + $0x1b8] sm:$0xff]
    %v1218 = vld [vmem:[#allocation11 + $0x1c0] sm:$0xff]
    %v1219 = vld [vmem:[#allocation11 + $0x1c8] sm:$0xff]
    %v1220 = vld [vmem:[#allocation11 + $0x1d0] sm:$0xff]
    %v1221 = vld [vmem:[#allocation11 + $0x1d8] sm:$0xff]
    %v1222 = vld [vmem:[#allocation11 + $0x1e0] sm:$0xff]
    %v1223 = vld [vmem:[#allocation11 + $0x1e8] sm:$0xff]
    %v1224 = vld [vmem:[#allocation11 + $0x1f0] sm:$0xff]
    %v1225 = vld [vmem:[#allocation11 + $0x1f8] sm:$0xff]
    %v1226 = vld [vmem:[%s9] sm:$0xff]
    %v1228 = vlaneseq
    %v1229 = vshrl.u32 %v1228, 7
    %v1230 = vsub.s32 0, %v1229
    %v1231 = vrot.slane %v1226, %v1230
    %v1232 = vlaneseq
    %v1233 = vshrl.u32 %v1232, 7
    %v1234 = vsub.s32 1, %v1233
    %v1235 = vrot.slane %v1226, %v1234
    %v1236 = vlaneseq
    %v1237 = vshrl.u32 %v1236, 7
    %v1238 = vsub.s32 2, %v1237
    %v1239 = vrot.slane %v1226, %v1238
    %v1240 = vlaneseq
    %v1241 = vshrl.u32 %v1240, 7
    %v1242 = vsub.s32 3, %v1241
    %v1243 = vrot.slane %v1226, %v1242
    %v1244 = vlaneseq
    %v1245 = vshrl.u32 %v1244, 7
    %v1246 = vsub.s32 4, %v1245
    %v1247 = vrot.slane %v1226, %v1246
    %v1248 = vlaneseq
    %v1249 = vshrl.u32 %v1248, 7
    %v1250 = vsub.s32 5, %v1249
    %v1251 = vrot.slane %v1226, %v1250
    %v1252 = vlaneseq
    %v1253 = vshrl.u32 %v1252, 7
    %v1254 = vsub.s32 6, %v1253
    %v1255 = vrot.slane %v1226, %v1254
    %v1256 = vlaneseq
    %v1257 = vshrl.u32 %v1256, 7
    %v1258 = vsub.s32 7, %v1257
    %v1259 = vrot.slane %v1226, %v1258
    %v1332 = vunpack.c.l.b16 %v1162
    %v1333 = vunpack.c.h.b16 %v1162
    %v1334 = vunpack.c.l.b16 %v1163
    %v1335 = vunpack.c.h.b16 %v1163
    %v1336 = vunpack.c.l.b16 %v1164
    %v1337 = vunpack.c.h.b16 %v1164
    %v1338 = vunpack.c.l.b16 %v1165
    %v1339 = vunpack.c.h.b16 %v1165
    %v1340 = vunpack.c.l.b16 %v1166
    %v1341 = vunpack.c.h.b16 %v1166
    %v1342 = vunpack.c.l.b16 %v1167
    %v1343 = vunpack.c.h.b16 %v1167
    %v1344 = vunpack.c.l.b16 %v1168
    %v1345 = vunpack.c.h.b16 %v1168
    %v1346 = vunpack.c.l.b16 %v1169
    %v1347 = vunpack.c.h.b16 %v1169
    %v1348 = vunpack.c.l.b16 %v1170
    %v1349 = vunpack.c.h.b16 %v1170
    %v1350 = vunpack.c.l.b16 %v1171
    %v1351 = vunpack.c.h.b16 %v1171
    %v1352 = vunpack.c.l.b16 %v1172
    %v1353 = vunpack.c.h.b16 %v1172
    %v1354 = vunpack.c.l.b16 %v1173
    %v1355 = vunpack.c.h.b16 %v1173
    %v1356 = vunpack.c.l.b16 %v1174
    %v1357 = vunpack.c.h.b16 %v1174
    %v1358 = vunpack.c.l.b16 %v1175
    %v1359 = vunpack.c.h.b16 %v1175
    %v1360 = vunpack.c.l.b16 %v1176
    %v1361 = vunpack.c.h.b16 %v1176
    %v1362 = vunpack.c.l.b16 %v1177
    %v1363 = vunpack.c.h.b16 %v1177
    %v1364 = vunpack.c.l.b16 %v1178
    %v1365 = vunpack.c.h.b16 %v1178
    %v1366 = vunpack.c.l.b16 %v1179
    %v1367 = vunpack.c.h.b16 %v1179
    %v1368 = vunpack.c.l.b16 %v1180
    %v1369 = vunpack.c.h.b16 %v1180
    %v1370 = vunpack.c.l.b16 %v1181
    %v1371 = vunpack.c.h.b16 %v1181
    %v1372 = vunpack.c.l.b16 %v1182
    %v1373 = vunpack.c.h.b16 %v1182
    %v1374 = vunpack.c.l.b16 %v1183
    %v1375 = vunpack.c.h.b16 %v1183
    %v1376 = vunpack.c.l.b16 %v1184
    %v1377 = vunpack.c.h.b16 %v1184
    %v1378 = vunpack.c.l.b16 %v1185
    %v1379 = vunpack.c.h.b16 %v1185
    %v1380 = vunpack.c.l.b16 %v1186
    %v1381 = vunpack.c.h.b16 %v1186
    %v1382 = vunpack.c.l.b16 %v1187
    %v1383 = vunpack.c.h.b16 %v1187
    %v1384 = vunpack.c.l.b16 %v1188
    %v1385 = vunpack.c.h.b16 %v1188
    %v1386 = vunpack.c.l.b16 %v1189
    %v1387 = vunpack.c.h.b16 %v1189
    %v1388 = vunpack.c.l.b16 %v1190
    %v1389 = vunpack.c.h.b16 %v1190
    %v1390 = vunpack.c.l.b16 %v1191
    %v1391 = vunpack.c.h.b16 %v1191
    %v1392 = vunpack.c.l.b16 %v1192
    %v1393 = vunpack.c.h.b16 %v1192
    %v1394 = vunpack.c.l.b16 %v1193
    %v1395 = vunpack.c.h.b16 %v1193
    %v1396 = vunpack.c.l.b16 %v1194
    %v1397 = vunpack.c.h.b16 %v1194
    %v1398 = vunpack.c.l.b16 %v1195
    %v1399 = vunpack.c.h.b16 %v1195
    %v1400 = vunpack.c.l.b16 %v1196
    %v1401 = vunpack.c.h.b16 %v1196
    %v1402 = vunpack.c.l.b16 %v1197
    %v1403 = vunpack.c.h.b16 %v1197
    %v1404 = vunpack.c.l.b16 %v1198
    %v1405 = vunpack.c.h.b16 %v1198
    %v1406 = vunpack.c.l.b16 %v1199
    %v1407 = vunpack.c.h.b16 %v1199
    %v1408 = vunpack.c.l.b16 %v1200
    %v1409 = vunpack.c.h.b16 %v1200
    %v1410 = vunpack.c.l.b16 %v1201
    %v1411 = vunpack.c.h.b16 %v1201
    %v1412 = vunpack.c.l.b16 %v1202
    %v1413 = vunpack.c.h.b16 %v1202
    %v1414 = vunpack.c.l.b16 %v1203
    %v1415 = vunpack.c.h.b16 %v1203
    %v1416 = vunpack.c.l.b16 %v1204
    %v1417 = vunpack.c.h.b16 %v1204
    %v1418 = vunpack.c.l.b16 %v1205
    %v1419 = vunpack.c.h.b16 %v1205
    %v1420 = vunpack.c.l.b16 %v1206
    %v1421 = vunpack.c.h.b16 %v1206
    %v1422 = vunpack.c.l.b16 %v1207
    %v1423 = vunpack.c.h.b16 %v1207
    %v1424 = vunpack.c.l.b16 %v1208
    %v1425 = vunpack.c.h.b16 %v1208
    %v1426 = vunpack.c.l.b16 %v1209
    %v1427 = vunpack.c.h.b16 %v1209
    %v1428 = vunpack.c.l.b16 %v1210
    %v1429 = vunpack.c.h.b16 %v1210
    %v1430 = vunpack.c.l.b16 %v1211
    %v1431 = vunpack.c.h.b16 %v1211
    %v1432 = vunpack.c.l.b16 %v1212
    %v1433 = vunpack.c.h.b16 %v1212
    %v1434 = vunpack.c.l.b16 %v1213
    %v1435 = vunpack.c.h.b16 %v1213
    %v1436 = vunpack.c.l.b16 %v1214
    %v1437 = vunpack.c.h.b16 %v1214
    %v1438 = vunpack.c.l.b16 %v1215
    %v1439 = vunpack.c.h.b16 %v1215
    %v1440 = vunpack.c.l.b16 %v1216
    %v1441 = vunpack.c.h.b16 %v1216
    %v1442 = vunpack.c.l.b16 %v1217
    %v1443 = vunpack.c.h.b16 %v1217
    %v1444 = vunpack.c.l.b16 %v1218
    %v1445 = vunpack.c.h.b16 %v1218
    %v1446 = vunpack.c.l.b16 %v1219
    %v1447 = vunpack.c.h.b16 %v1219
    %v1448 = vunpack.c.l.b16 %v1220
    %v1449 = vunpack.c.h.b16 %v1220
    %v1450 = vunpack.c.l.b16 %v1221
    %v1451 = vunpack.c.h.b16 %v1221
    %v1452 = vunpack.c.l.b16 %v1222
    %v1453 = vunpack.c.h.b16 %v1222
    %v1454 = vunpack.c.l.b16 %v1223
    %v1455 = vunpack.c.h.b16 %v1223
    %v1456 = vunpack.c.l.b16 %v1224
    %v1457 = vunpack.c.h.b16 %v1224
    %v1458 = vunpack.c.l.b16 %v1225
    %v1459 = vunpack.c.h.b16 %v1225
    %v1460 = vpack.c.b16 %v1340, %v1332
    %v1461 = vpack.c.b16 %v1341, %v1333
    %v1462 = vpack.c.b16 %v1342, %v1334
    %v1463 = vpack.c.b16 %v1343, %v1335
    %v1464 = vpack.c.b16 %v1344, %v1336
    %v1465 = vpack.c.b16 %v1345, %v1337
    %v1466 = vpack.c.b16 %v1346, %v1338
    %v1467 = vpack.c.b16 %v1347, %v1339
    %v1468 = vpack.c.b16 %v1356, %v1348
    %v1469 = vpack.c.b16 %v1357, %v1349
    %v1470 = vpack.c.b16 %v1358, %v1350
    %v1471 = vpack.c.b16 %v1359, %v1351
    %v1472 = vpack.c.b16 %v1360, %v1352
    %v1473 = vpack.c.b16 %v1361, %v1353
    %v1474 = vpack.c.b16 %v1362, %v1354
    %v1475 = vpack.c.b16 %v1363, %v1355
    %v1476 = vpack.c.b16 %v1372, %v1364
    %v1477 = vpack.c.b16 %v1373, %v1365
    %v1478 = vpack.c.b16 %v1374, %v1366
    %v1479 = vpack.c.b16 %v1375, %v1367
    %v1480 = vpack.c.b16 %v1376, %v1368
    %v1481 = vpack.c.b16 %v1377, %v1369
    %v1482 = vpack.c.b16 %v1378, %v1370
    %v1483 = vpack.c.b16 %v1379, %v1371
    %v1484 = vpack.c.b16 %v1388, %v1380
    %v1485 = vpack.c.b16 %v1389, %v1381
    %v1486 = vpack.c.b16 %v1390, %v1382
    %v1487 = vpack.c.b16 %v1391, %v1383
    %v1488 = vpack.c.b16 %v1392, %v1384
    %v1489 = vpack.c.b16 %v1393, %v1385
    %v1490 = vpack.c.b16 %v1394, %v1386
    %v1491 = vpack.c.b16 %v1395, %v1387
    %v1492 = vpack.c.b16 %v1404, %v1396
    %v1493 = vpack.c.b16 %v1405, %v1397
    %v1494 = vpack.c.b16 %v1406, %v1398
    %v1495 = vpack.c.b16 %v1407, %v1399
    %v1496 = vpack.c.b16 %v1408, %v1400
    %v1497 = vpack.c.b16 %v1409, %v1401
    %v1498 = vpack.c.b16 %v1410, %v1402
    %v1499 = vpack.c.b16 %v1411, %v1403
    %v1500 = vpack.c.b16 %v1420, %v1412
    %v1501 = vpack.c.b16 %v1421, %v1413
    %v1502 = vpack.c.b16 %v1422, %v1414
    %v1503 = vpack.c.b16 %v1423, %v1415
    %v1504 = vpack.c.b16 %v1424, %v1416
    %v1505 = vpack.c.b16 %v1425, %v1417
    %v1506 = vpack.c.b16 %v1426, %v1418
    %v1507 = vpack.c.b16 %v1427, %v1419
    %v1508 = vpack.c.b16 %v1436, %v1428
    %v1509 = vpack.c.b16 %v1437, %v1429
    %v1510 = vpack.c.b16 %v1438, %v1430
    %v1511 = vpack.c.b16 %v1439, %v1431
    %v1512 = vpack.c.b16 %v1440, %v1432
    %v1513 = vpack.c.b16 %v1441, %v1433
    %v1514 = vpack.c.b16 %v1442, %v1434
    %v1515 = vpack.c.b16 %v1443, %v1435
    %v1516 = vpack.c.b16 %v1452, %v1444
    %v1517 = vpack.c.b16 %v1453, %v1445
    %v1518 = vpack.c.b16 %v1454, %v1446
    %v1519 = vpack.c.b16 %v1455, %v1447
    %v1520 = vpack.c.b16 %v1456, %v1448
    %v1521 = vpack.c.b16 %v1457, %v1449
    %v1522 = vpack.c.b16 %v1458, %v1450
    %v1523 = vpack.c.b16 %v1459, %v1451
    %1588 = vmatprep.subr.bf16.mxu0 %v1517
    %1589 = vmatpush1.bf16.msra.mxu0 %v1516
    %1590 = vmatprep.subr.bf16.mxu0 %v1509
    %1591 = vmatpush1.bf16.msra.mxu0 %v1508
    %1592 = vmatprep.subr.bf16.mxu0 %v1501
    %1593 = vmatpush1.bf16.msra.mxu0 %v1500
    %1594 = vmatprep.subr.bf16.mxu0 %v1493
    %1595 = vmatpush1.bf16.msra.mxu0 %v1492
    %1596 = vmatprep.subr.bf16.mxu0 %v1485
    %1597 = vmatpush1.bf16.msra.mxu0 %v1484
    %1598 = vmatprep.subr.bf16.mxu0 %v1477
    %1599 = vmatpush1.bf16.msra.mxu0 %v1476
    %1600 = vmatprep.subr.bf16.mxu0 %v1469
    %1601 = vmatpush1.bf16.msra.mxu0 %v1468
    %1602 = vmatprep.subr.bf16.mxu0 %v1461
    %1603 = vmatpush1.bf16.msra.mxu0 %v1460
    %1604 = vmatprep.subr.bf16.mxu0 0
    %1605 = vmatpush2.bf16.msra.mxu0 0
    %1606 = vmatprep.subr.bf16.mxu0 0
    %1607 = vmatpush2.bf16.msra.mxu0 0
    %1608 = vmatprep.subr.bf16.mxu0 0
    %1609 = vmatpush2.bf16.msra.mxu0 0
    %1610 = vmatprep.subr.bf16.mxu0 0
    %1611 = vmatpush2.bf16.msra.mxu0 0
    %1612 = vmatprep.subr.bf16.mxu0 0
    %1613 = vmatpush2.bf16.msra.mxu0 0
    %1614 = vmatprep.subr.bf16.mxu0 0
    %1615 = vmatpush2.bf16.msra.mxu0 0
    %1616 = vmatprep.subr.bf16.mxu0 0
    %1617 = vmatpush2.bf16.msra.mxu0 0
    %1618 = vmatprep.subr.bf16.mxu0 0
    %1619 = vmatpush2.bf16.msra.mxu0 0
    %1620 = vmatprep.mubr.bf16.mxu0 0
    %1621 = vmatmul.mubr.bf16.gmra.mxu0 %v1161
    %v1622 = vpop.f32.mrf.mxu0
    %v1623 = vadd.f32 %v1231, %v1622
    %v1624 = vpop.f32.mrf.mxu0
    %v1625 = vadd.f32 %v1235, %v1624
    %v1626 = vpop.f32.mrf.mxu0
    %v1627 = vpop.f32.mrf.mxu0
    %1628 = vdwg.mxu0
    %1629 = vmatprep.subr.bf16.mxu0 %v1519
    %1630 = vmatpush1.bf16.msra.mxu0 %v1518
    %1631 = vmatprep.subr.bf16.mxu0 %v1511
    %1632 = vmatpush1.bf16.msra.mxu0 %v1510
    %1633 = vmatprep.subr.bf16.mxu0 %v1503
    %1634 = vmatpush1.bf16.msra.mxu0 %v1502
    %1635 = vmatprep.subr.bf16.mxu0 %v1495
    %1636 = vmatpush1.bf16.msra.mxu0 %v1494
    %1637 = vmatprep.subr.bf16.mxu0 %v1487
    %1638 = vmatpush1.bf16.msra.mxu0 %v1486
    %1639 = vmatprep.subr.bf16.mxu0 %v1479
    %1640 = vmatpush1.bf16.msra.mxu0 %v1478
    %1641 = vmatprep.subr.bf16.mxu0 %v1471
    %1642 = vmatpush1.bf16.msra.mxu0 %v1470
    %1643 = vmatprep.subr.bf16.mxu0 %v1463
    %1644 = vmatpush1.bf16.msra.mxu0 %v1462
    %1645 = vmatprep.subr.bf16.mxu0 0
    %1646 = vmatpush2.bf16.msra.mxu0 0
    %1647 = vmatprep.subr.bf16.mxu0 0
    %1648 = vmatpush2.bf16.msra.mxu0 0
    %1649 = vmatprep.subr.bf16.mxu0 0
    %1650 = vmatpush2.bf16.msra.mxu0 0
    %1651 = vmatprep.subr.bf16.mxu0 0
    %1652 = vmatpush2.bf16.msra.mxu0 0
    %1653 = vmatprep.subr.bf16.mxu0 0
    %1654 = vmatpush2.bf16.msra.mxu0 0
    %1655 = vmatprep.subr.bf16.mxu0 0
    %1656 = vmatpush2.bf16.msra.mxu0 0
    %1657 = vmatprep.subr.bf16.mxu0 0
    %1658 = vmatpush2.bf16.msra.mxu0 0
    %1659 = vmatprep.subr.bf16.mxu0 0
    %1660 = vmatpush2.bf16.msra.mxu0 0
    %1661 = vmatprep.mubr.bf16.mxu0 0
    %1662 = vmatmul.mubr.bf16.gmra.mxu0 %v1161
    %v1663 = vpop.f32.mrf.mxu0
    %v1664 = vadd.f32 %v1239, %v1663
    %v1665 = vpop.f32.mrf.mxu0
    %v1666 = vadd.f32 %v1243, %v1665
    %v1667 = vpop.f32.mrf.mxu0
    %v1668 = vpop.f32.mrf.mxu0
    %1669 = vdwg.mxu0
    %1670 = vmatprep.subr.bf16.mxu0 %v1521
    %1671 = vmatpush1.bf16.msra.mxu0 %v1520
    %1672 = vmatprep.subr.bf16.mxu0 %v1513
    %1673 = vmatpush1.bf16.msra.mxu0 %v1512
    %1674 = vmatprep.subr.bf16.mxu0 %v1505
    %1675 = vmatpush1.bf16.msra.mxu0 %v1504
    %1676 = vmatprep.subr.bf16.mxu0 %v1497
    %1677 = vmatpush1.bf16.msra.mxu0 %v1496
    %1678 = vmatprep.subr.bf16.mxu0 %v1489
    %1679 = vmatpush1.bf16.msra.mxu0 %v1488
    %1680 = vmatprep.subr.bf16.mxu0 %v1481
    %1681 = vmatpush1.bf16.msra.mxu0 %v1480
    %1682 = vmatprep.subr.bf16.mxu0 %v1473
    %1683 = vmatpush1.bf16.msra.mxu0 %v1472
    %1684 = vmatprep.subr.bf16.mxu0 %v1465
    %1685 = vmatpush1.bf16.msra.mxu0 %v1464
    %1686 = vmatprep.subr.bf16.mxu0 0
    %1687 = vmatpush2.bf16.msra.mxu0 0
    %1688 = vmatprep.subr.bf16.mxu0 0
    %1689 = vmatpush2.bf16.msra.mxu0 0
    %1690 = vmatprep.subr.bf16.mxu0 0
    %1691 = vmatpush2.bf16.msra.mxu0 0
    %1692 = vmatprep.subr.bf16.mxu0 0
    %1693 = vmatpush2.bf16.msra.mxu0 0
    %1694 = vmatprep.subr.bf16.mxu0 0
    %1695 = vmatpush2.bf16.msra.mxu0 0
    %1696 = vmatprep.subr.bf16.mxu0 0
    %1697 = vmatpush2.bf16.msra.mxu0 0
    %1698 = vmatprep.subr.bf16.mxu0 0
    %1699 = vmatpush2.bf16.msra.mxu0 0
    %1700 = vmatprep.subr.bf16.mxu0 0
    %1701 = vmatpush2.bf16.msra.mxu0 0
    %1702 = vmatprep.mubr.bf16.mxu0 0
    %1703 = vmatmul.mubr.bf16.gmra.mxu0 %v1161
    %v1704 = vpop.f32.mrf.mxu0
    %v1705 = vadd.f32 %v1247, %v1704
    %v1706 = vpop.f32.mrf.mxu0
    %v1707 = vadd.f32 %v1251, %v1706
    %v1708 = vpop.f32.mrf.mxu0
    %v1709 = vpop.f32.mrf.mxu0
    %1710 = vdwg.mxu0
    %1711 = vmatprep.subr.bf16.mxu0 %v1523
    %1712 = vmatpush1.bf16.msra.mxu0 %v1522
    %1713 = vmatprep.subr.bf16.mxu0 %v1515
    %1714 = vmatpush1.bf16.msra.mxu0 %v1514
    %1715 = vmatprep.subr.bf16.mxu0 %v1507
    %1716 = vmatpush1.bf16.msra.mxu0 %v1506
    %1717 = vmatprep.subr.bf16.mxu0 %v1499
    %1718 = vmatpush1.bf16.msra.mxu0 %v1498
    %1719 = vmatprep.subr.bf16.mxu0 %v1491
    %1720 = vmatpush1.bf16.msra.mxu0 %v1490
    %1721 = vmatprep.subr.bf16.mxu0 %v1483
    %1722 = vmatpush1.bf16.msra.mxu0 %v1482
    %1723 = vmatprep.subr.bf16.mxu0 %v1475
    %1724 = vmatpush1.bf16.msra.mxu0 %v1474
    %1725 = vmatprep.subr.bf16.mxu0 %v1467
    %1726 = vmatpush1.bf16.msra.mxu0 %v1466
    %1727 = vmatprep.subr.bf16.mxu0 0
    %1728 = vmatpush2.bf16.msra.mxu0 0
    %1729 = vmatprep.subr.bf16.mxu0 0
    %1730 = vmatpush2.bf16.msra.mxu0 0
    %1731 = vmatprep.subr.bf16.mxu0 0
    %1732 = vmatpush2.bf16.msra.mxu0 0
    %1733 = vmatprep.subr.bf16.mxu0 0
    %1734 = vmatpush2.bf16.msra.mxu0 0
    %1735 = vmatprep.subr.bf16.mxu0 0
    %1736 = vmatpush2.bf16.msra.mxu0 0
    %1737 = vmatprep.subr.bf16.mxu0 0
    %1738 = vmatpush2.bf16.msra.mxu0 0
    %1739 = vmatprep.subr.bf16.mxu0 0
    %1740 = vmatpush2.bf16.msra.mxu0 0
    %1741 = vmatprep.subr.bf16.mxu0 0
    %1742 = vmatpush2.bf16.msra.mxu0 0
    %1743 = vmatprep.mubr.bf16.mxu0 0
    %1744 = vmatmul.mubr.bf16.gmra.mxu0 %v1161
    %v1745 = vpop.f32.mrf.mxu0
    %v1746 = vadd.f32 %v1255, %v1745
    %v1747 = vpop.f32.mrf.mxu0
    %v1748 = vadd.f32 %v1259, %v1747
    %v1749 = vpop.f32.mrf.mxu0
    %v1750 = vpop.f32.mrf.mxu0
    %1751 = vdwg.mxu0
    %1752 = vst [vmem:[#allocation13] sm:$0xff] %v1623
    %1753 = vst [vmem:[#allocation13 + $0x8] sm:$0xff] %v1625
    %1754 = vst [vmem:[#allocation13 + $0x10] sm:$0xff] %v1664
    %1755 = vst [vmem:[#allocation13 + $0x18] sm:$0xff] %v1666
    %1756 = vst [vmem:[#allocation13 + $0x20] sm:$0xff] %v1705
    %1757 = vst [vmem:[#allocation13 + $0x28] sm:$0xff] %v1707
    %1758 = vst [vmem:[#allocation13 + $0x30] sm:$0xff] %v1746
    %1759 = vst [vmem:[#allocation13 + $0x38] sm:$0xff] %v1748
    // Predicated region
    $region66: #{tpu_custom_call.1} parent=1 // pred_check
      _
    $region67: #{tpu_custom_call.1} parent=1 // pred_check_branch
      %1761 = sbr.rel (0) target = $region69
    $region68: #{tpu_custom_call.1} parent=1 // pred_region
      %s1763 = ssub.s32 1024, 1024
      %1764 = vsyncadd [#allocation4], %s1763
      %s1766 = sshll.u32 [#allocation13], 4
      %s1767 = int_to_ptr.vmem [resolvable:$true] %s1766
      %1769 = dma.vmem_to_hbm [thread:$0]  %s1767, 1024, %s10, [#allocation4]
    $region69: #{tpu_custom_call.1} parent=1 // pred_fallthru
      _
    // Predicated region
    $region70: #{tpu_custom_call.1} parent=1 // pred_check
      _
    $region71: #{tpu_custom_call.1} parent=1 // pred_check_branch
      %1771 = sbr.rel (0) target = $region73
    $region72: #{tpu_custom_call.1} parent=1 // pred_region
      %1772 = dma.done [#allocation4], 1024
    $region73: #{tpu_custom_call.1} parent=1 // pred_fallthru
      _
    %1773 = vsyncpa [#allocation3], 1
    %1774 = vsyncpa [#allocation6], 1
    %1775 = vsyncpa [#allocation9], 1
    %1776 = vsyncpa [#allocation12], 1
    %1777 = vsyncpa [#allocation4], 1

</llo_original>
